<compile_context>
chip_gen: v7x
topology: tpu7x:2x2x1
jax: 0.10.0
libtpu: 0.0.40
codegen_flags: <defaults>
</compile_context>

<pallas_src>
import functools

import jax
import jax.numpy as jnp
from jax.experimental import pallas as pl
from jax.experimental.pallas import tpu as pltpu


def _round_up(a, b):
    return (a + b - 1) // b * b


def _apply_acti(y, acti, leaky_slope):
    if acti == "relu":
        return jnp.maximum(y, 0.0)
    if acti == "leaky_relu":
        return jnp.where(y >= 0.0, y, jnp.float32(leaky_slope) * y)
    return y


def _conv_bn_act_kernel_1k(p_ref, w_ref, shift_ref, o_ref, *, acti, leaky_slope):
    # p_ref: (tm, K) bf16 im2col rows; w_ref: (K, Cpad) bf16 (BN scale folded
    # in); shift_ref: (1, Cpad) f32 (conv bias + BN shift).  Single K step:
    # write the MXU result straight to the output tile (no accumulator).
    y = jnp.dot(p_ref[...], w_ref[...], preferred_element_type=jnp.float32)
    y = y + shift_ref[...]
    o_ref[...] = _apply_acti(y, acti, leaky_slope).astype(o_ref.dtype)


def _conv_bn_act_kernel_mk(p_ref, w_ref, shift_ref, o_ref, acc_ref, *,
                           tk, acti, leaky_slope):
    # Large-K fallback: grid = (M tiles, K tiles).  The full (K_pad, Cpad)
    # weight is VMEM-resident (constant index_map) and sliced in-kernel.
    k = pl.program_id(1)

    @pl.when(k == 0)
    def _():
        acc_ref[...] = jnp.zeros_like(acc_ref)

    k0 = pl.multiple_of(k * tk, 128)
    acc_ref[...] += jnp.dot(p_ref[...], w_ref[pl.ds(k0, tk), :],
                            preferred_element_type=jnp.float32)

    @pl.when(k == pl.num_programs(1) - 1)
    def _():
        y = acc_ref[...] + shift_ref[...]
        o_ref[...] = _apply_acti(y, acti, leaky_slope).astype(o_ref.dtype)


def _im2col_3d(xp, ksize, stride, dilation):
    """xp: (N, Dp, Hp, Wp, C) padded channels-last input.
    Returns (patches (N, Do, Ho, Wo, kd*kh*kw*C), (Do, Ho, Wo));
    patch channel order is tap-major, channel-minor."""
    kd, kh, kw = ksize
    sd, sh, sw = stride
    dd, dh, dw = dilation
    _, Dp, Hp, Wp, _ = xp.shape
    Do = (Dp - dd * (kd - 1) - 1) // sd + 1
    Ho = (Hp - dh * (kh - 1) - 1) // sh + 1
    Wo = (Wp - dw * (kw - 1) - 1) // sw + 1
    cols = []
    for a in range(kd):
        for b in range(kh):
            for c in range(kw):
                cols.append(
                    xp[:, a * dd: a * dd + sd * (Do - 1) + 1: sd,
                          b * dh: b * dh + sh * (Ho - 1) + 1: sh,
                          c * dw: c * dw + sw * (Wo - 1) + 1: sw, :])
    return jnp.concatenate(cols, axis=-1), (Do, Ho, Wo)


def _vmem_capacity_bytes():
    try:
        cap = getattr(pltpu.get_tpu_info(), "vmem_capacity_bytes", None)
        if cap:
            return int(cap)
    except Exception:
        pass
    return 64 << 20       # v7x per-TensorCore VMEM: safe lower bound


def convolution_layer(x, conv_w, conv_b,
                      bn_gamma=None, bn_beta=None, bn_mean=None, bn_var=None,
                      *, stride=(1, 1, 1), padding=(0, 0, 0), dilation=(1, 1, 1),
                      eps=1e-5, acti_func="relu", leaky_slope=0.01,
                      max_tile_m=1024, max_tile_k=2048):
    """ConvolutionLayer forward: Conv3d -> (BatchNorm3d, inference) -> activation.

    x:      (N, Cin, D, H, W) float32
    conv_w: (Cout, Cin, kd, kh, kw); conv_b: (Cout,) or None
    bn_*:   (Cout,) running-stat / affine params, or None to disable batch_norm.
    """
    if acti_func not in ("relu", "leaky_relu", "none", None):
        raise ValueError(f"unsupported acti_func: {acti_func!r}")
    N, C_in, D, H, W = x.shape
    C_out, C_in_w, kd, kh, kw = conv_w.shape
    assert C_in_w == C_in, "groups != 1 not supported"

    # ---- layout glue in JAX: channels-last bf16, zero pad, im2col ------------
    pd, ph, pw = padding
    x_cl = jnp.transpose(x, (0, 2, 3, 4, 1)).astype(jnp.bfloat16)   # (N,D,H,W,C)
    xp = jnp.pad(x_cl, ((0, 0), (pd, pd), (ph, ph), (pw, pw), (0, 0)))
    patches, (Do, Ho, Wo) = _im2col_3d(xp, (kd, kh, kw), stride, dilation)
    K = kd * kh * kw * C_in
    M = N * Do * Ho * Wo
    p2 = patches.reshape(M, K)

    # ---- fold conv bias + inference BN into the weights / a lane shift -------
    # Conv is linear: (P @ W) * scale == P @ (W * scale), so the BN scale is
    # folded into the weight columns and only `shift` survives in the epilogue.
    w_mat = jnp.transpose(conv_w, (2, 3, 4, 1, 0)).reshape(K, C_out)
    w_mat = w_mat.astype(jnp.float32)
    if bn_gamma is not None:
        inv_std = jax.lax.rsqrt(bn_var.astype(jnp.float32) + eps)
        scale = bn_gamma.astype(jnp.float32) * inv_std
        shift = bn_beta.astype(jnp.float32) - bn_mean.astype(jnp.float32) * scale
    else:
        scale = jnp.ones((C_out,), jnp.float32)
        shift = jnp.zeros((C_out,), jnp.float32)
    if conv_b is not None:
        shift = shift + conv_b.astype(jnp.float32) * scale
    w_mat = w_mat * scale[None, :]

    # ---- lane-dense output: pad Cout up to a multiple of 128 -----------------
    C_pad = _round_up(C_out, 128)
    w_mat = jnp.pad(w_mat, ((0, 0), (0, C_pad - C_out))).astype(jnp.bfloat16)
    shift2 = jnp.pad(shift, (0, C_pad - C_out)).reshape(1, C_pad)

    # ---- K tiling: single block when it fits, minimal-padding split otherwise
    K128 = _round_up(K, 128)
    if K128 <= max_tile_k:
        nk, tk, K_pad = 1, K, K              # no K padding in the 1-block path
    else:
        nk = -(-K128 // max_tile_k)          # ceil
        tk = _round_up(-(-K128 // nk), 128)
        K_pad = tk * nk
        p2 = jnp.pad(p2, ((0, 0), (0, K_pad - K)))
        w_mat = jnp.pad(w_mat, ((0, K_pad - K), (0, 0)))

    # ---- generation-aware tile rows (tm) & scoped-VMEM limit ------------------
    vmem_cap = _vmem_capacity_bytes()                  # 64 MiB v7x / 128 MiB v5e,v6e
    vmem_limit = int(min(0.75 * vmem_cap, 100 << 20))  # ~48 MiB v7x, ~96 MiB v5e/v6e
    resident = K_pad * C_pad * 2 + C_pad * 4           # weight (bf16) + shift (f32)
    budget = vmem_limit - resident - (4 << 20)         # headroom for Mosaic scratch
    per_row = 2 * tk * 2 + 2 * C_pad * 4               # 2x patch (bf16) + 2x out (f32)
    if nk > 1:
        per_row += C_pad * 4                           # f32 accumulator
    tm = max(8, min(max_tile_m, budget // per_row, _round_up(M, 8)))
    tm = max(8, (tm // 8) * 8)
    M_pad = _round_up(M, tm)
    if M_pad != M:
        p2 = jnp.pad(p2, ((0, M_pad - M), (0, 0)))

    # ---- pallas_call ----------------------------------------------------------
    if nk == 1:
        grid = (M_pad // tm,)
        kernel = functools.partial(_conv_bn_act_kernel_1k,
                                   acti=acti_func, leaky_slope=leaky_slope)
        in_specs = [
            pl.BlockSpec((tm, K_pad), lambda m: (m, 0)),         # im2col rows
            pl.BlockSpec((K_pad, C_pad), lambda m: (0, 0)),      # resident weight
            pl.BlockSpec((1, C_pad), lambda m: (0, 0)),          # resident shift
        ]
        out_spec = pl.BlockSpec((tm, C_pad), lambda m: (m, 0))
        scratch = []
        dims = ("parallel",)
    else:
        grid = (M_pad // tm, nk)
        kernel = functools.partial(_conv_bn_act_kernel_mk, tk=tk,
                                   acti=acti_func, leaky_slope=leaky_slope)
        in_specs = [
            pl.BlockSpec((tm, tk), lambda m, k: (m, k)),         # im2col rows
            pl.BlockSpec((K_pad, C_pad), lambda m, k: (0, 0)),   # resident weight
            pl.BlockSpec((1, C_pad), lambda m, k: (0, 0)),       # resident shift
        ]
        out_spec = pl.BlockSpec((tm, C_pad), lambda m, k: (m, 0))
        scratch = [pltpu.VMEM((tm, C_pad), jnp.float32)]
        dims = ("parallel", "arbitrary")

    out_flat = pl.pallas_call(
        kernel,
        out_shape=jax.ShapeDtypeStruct((M_pad, C_pad), x.dtype),
        grid_spec=pltpu.PrefetchScalarGridSpec(
            num_scalar_prefetch=0,
            grid=grid,
            in_specs=in_specs,
            out_specs=out_spec,
            scratch_shapes=scratch,
        ),
        compiler_params=pltpu.CompilerParams(
            dimension_semantics=dims,
            vmem_limit_bytes=vmem_limit),
    )(p2, w_mat, shift2)

    out = out_flat[:M, :C_out].reshape(N, Do, Ho, Wo, C_out)
    # NOTE: the module contract is NCDHW; if the caller can consume NDHWC, the
    # transposes on both ends (two full activation relayout passes) can be
    # dropped.
    return jnp.transpose(out, (0, 4, 1, 2, 3))                    # back to NCDHW


def _ref_convolution_layer(x, conv_w, conv_b, bn_gamma, bn_beta, bn_mean, bn_var,
                           *, stride, padding, dilation, eps=1e-5,
                           acti_func="relu", leaky_slope=0.01):
    # Pure-JAX reference mirroring the PyTorch forward (inference BN).
    pd, ph, pw = padding
    y = jax.lax.conv_general_dilated(
        x, conv_w, window_strides=stride,
        padding=[(pd, pd), (ph, ph), (pw, pw)],
        rhs_dilation=dilation,
        dimension_numbers=("NCDHW", "OIDHW", "NCDHW"),
        precision=jax.lax.Precision.HIGHEST)
    if conv_b is not None:
        y = y + conv_b[None, :, None, None, None]
    if bn_gamma is not None:
        inv_std = jax.lax.rsqrt(bn_var + eps)
        scale = bn_gamma * inv_std
        shift = bn_beta - bn_mean * scale
        y = y * scale[None, :, None, None, None] + shift[None, :, None, None, None]
    if acti_func == "relu":
        y = jnp.maximum(y, 0.0)
    elif acti_func == "leaky_relu":
        y = jnp.where(y >= 0.0, y, leaky_slope * y)
    return y


if __name__ == "__main__":
    # Small NCDHW shapes consistent with Conv3d(Cin=4, Cout=8, k=3, padding=1).
    N, C_in, C_out = 2, 4, 8
    D, H, W = 4, 16, 16
    k = 3
    stride, padding, dilation = (1, 1, 1), (1, 1, 1), (1, 1, 1)

    key = jax.random.PRNGKey(0)
    kx, kwt, kb, kg, kbe, kme, kva = jax.random.split(key, 7)
    x = jax.random.normal(kx, (N, C_in, D, H, W), dtype=jnp.float32)
    conv_w = jax.random.normal(kwt, (C_out, C_in, k, k, k), jnp.float32) * 0.1
    conv_b = jax.random.normal(kb, (C_out,), jnp.float32) * 0.1
    bn_gamma = 1.0 + 0.1 * jax.random.normal(kg, (C_out,), jnp.float32)
    bn_beta = 0.1 * jax.random.normal(kbe, (C_out,), jnp.float32)
    bn_mean = 0.1 * jax.random.normal(kme, (C_out,), jnp.float32)
    bn_var = 0.5 + jnp.abs(jax.random.normal(kva, (C_out,), jnp.float32))

    out = convolution_layer(x, conv_w, conv_b, bn_gamma, bn_beta, bn_mean, bn_var,
                            stride=stride, padding=padding, dilation=dilation,
                            acti_func="relu")
    out = jax.block_until_ready(out)

    ref = _ref_convolution_layer(x, conv_w, conv_b, bn_gamma, bn_beta, bn_mean,
                                 bn_var, stride=stride, padding=padding,
                                 dilation=dilation, acti_func="relu")
    assert out.shape == ref.shape
    # Tolerance covers bf16 patch/weight rounding (f32 MXU accumulation) vs the
    # f32 HIGHEST-precision XLA reference; structural errors are O(0.1-1).
    assert jnp.allclose(out, ref, atol=2e-2, rtol=2e-2), "mismatch vs reference"

    print("KERNEL_OK")
</pallas_src>

<mosaic_0001>
module attributes {stable_mosaic.version = 11 : i64} {
  func.func @_conv_bn_act_kernel_1k(%arg0: i32, %arg1: memref<1024x108xbf16, #tpu.memory_space<vmem>>, %arg2: memref<108x128xbf16, #tpu.memory_space<vmem>>, %arg3: memref<1x128xf32, #tpu.memory_space<vmem>>, %arg4: memref<1024x128xf32, #tpu.memory_space<vmem>>) attributes {dimension_semantics = [#tpu.dimension_semantics<parallel>], iteration_bounds = array<i64: 2>, scalar_prefetch = 0 : i64, scratch_operands = 0 : i64, tpu.core_type = #tpu.core_type<tc>, window_params = [{transform_indices = @transform_0, window_bounds = array<i64: 1024, 108>}, {pipeline_mode = #tpu.pipeline_mode<synchronous>, transform_indices = @transform_1, window_bounds = array<i64: 108, 128>}, {pipeline_mode = #tpu.pipeline_mode<synchronous>, transform_indices = @transform_2, window_bounds = array<i64: 1, 128>}, {transform_indices = @transform_3, window_bounds = array<i64: 1024, 128>}]} {
    %c0 = arith.constant 0 : index
    %c0_0 = arith.constant 0 : index
    %0 = vector.load %arg1[%c0, %c0_0] : memref<1024x108xbf16, #tpu.memory_space<vmem>>, vector<1024x108xbf16>
    %c0_1 = arith.constant 0 : index
    %c0_2 = arith.constant 0 : index
    %1 = vector.load %arg2[%c0_1, %c0_2] : memref<108x128xbf16, #tpu.memory_space<vmem>>, vector<108x128xbf16>
    %cst = arith.constant dense<0.000000e+00> : vector<1024x128xf32>
    %2 = tpu.matmul %0, %1, %cst {dimension_numbers = #tpu.dot_dimension_numbers<[1], [0], [0], [1], [0, 0, 1, 1], [], []>} : vector<1024x108xbf16>, vector<108x128xbf16>, vector<1024x128xf32> -> vector<1024x128xf32>
    %c0_3 = arith.constant 0 : index
    %c0_4 = arith.constant 0 : index
    %3 = vector.load %arg3[%c0_3, %c0_4] : memref<1x128xf32, #tpu.memory_space<vmem>>, vector<1x128xf32>
    %4 = vector.broadcast %3 : vector<1x128xf32> to vector<1024x128xf32>
    %5 = arith.addf %2, %4 : vector<1024x128xf32>
    %cst_5 = arith.constant 0.000000e+00 : f32
    %6 = vector.broadcast %cst_5 : f32 to vector<1024x128xf32>
    %7 = arith.maximumf %5, %6 : vector<1024x128xf32>
    %c0_6 = arith.constant 0 : index
    %c0_7 = arith.constant 0 : index
    %8 = vector.load %arg4[%c0_6, %c0_7] : memref<1024x128xf32, #tpu.memory_space<vmem>>, vector<1024x128xf32>
    tpu.vector_store %arg4[%c0_6, %c0_7], %7 {strides = array<i32>} : memref<1024x128xf32, #tpu.memory_space<vmem>>, vector<1024x128xf32>,
    return
  }
  func.func @transform_0(%arg0: i32) -> (i32, i32) {
    %c0_i32 = arith.constant 0 : i32
    %c0_i32_0 = arith.constant 0 : i32
    return %arg0, %c0_i32 : i32, i32
  }
  func.func @transform_1(%arg0: i32) -> (i32, i32) {
    %c0_i32 = arith.constant 0 : i32
    %c0_i32_0 = arith.constant 0 : i32
    %c0_i32_1 = arith.constant 0 : i32
    return %c0_i32, %c0_i32_0 : i32, i32
  }
  func.func @transform_2(%arg0: i32) -> (i32, i32) {
    %c0_i32 = arith.constant 0 : i32
    %c0_i32_0 = arith.constant 0 : i32
    %c0_i32_1 = arith.constant 0 : i32
    return %c0_i32, %c0_i32_0 : i32, i32
  }
  func.func @transform_3(%arg0: i32) -> (i32, i32) {
    %c0_i32 = arith.constant 0 : i32
    %c0_i32_0 = arith.constant 0 : i32
    return %arg0, %c0_i32 : i32, i32
  }
}

</mosaic_0001>

<llo_original>
// kernel: tpu_custom_call.1
$region0: #{tpu_custom_call.1}
  #allocation0 [shape = 'u32[]', space=smem, size = 0x4, offset = 0x4, fixed_abs, tag = 'smem constant byte address 0x4 - core index']
  #allocation1 [shape = 'u32[144,128]{1,0:T(1,128)}', space=vmem, size = 0x12000, scoped, tag = 'internal scratch']
  %s0 = inlined_call_operand.vmem [shape: bf16[2048,108], index: 0, kind: input, shape index: {}]
  %s1 = inlined_call_operand.vmem [shape: bf16[108,128], index: 1, kind: input, shape index: {}]
  %s2 = inlined_call_operand.vmem [shape: f32[1,128], index: 2, kind: input, shape index: {}]
  %s3 = inlined_call_operand.hbm [shape: f32[2048,128], index: 3, kind: output, shape index: {}]
  %s4 = sld [smem:[#allocation0]]
  $region45: #{tpu_custom_call.1} parent=0
    _
  %s6 = ssub.s32 1, %s4
  %s7 = scalar_select 0, %s6, %s4
  $region1: #{tpu_custom_call.1} parent=0
    #allocation2 [shape = 'u8[1048576]{0}', space=vmem, size = 0x100000, scoped, tag = 'output window, operand 0']
    #allocation3 [shape = 's32[2]{0}', space=sflag, size = 0x8, scoped, tag = 'scoped memory for tpu_custom_call.1']
    %8 = vsyncpa [#allocation3], 0
    %s9 = scalar_lea.sflag [#allocation3], 1
    %10 = vsyncpa %s9, 0
    loop: start=0, step=1, limit=4
    $region2: #{tpu_custom_call.1} parent=1 // loop_pre_header
      _
    $region3: #{tpu_custom_call.1} parent=1 // loop_header
      %s12 = sphi 0, %s16
      %p13 = scmp.ge.s32.totalorder %s12, 4
      %s22 = sphi 0, %s24
      %s25 = sphi 0, %s22
      %s26 = sphi 0, %s25
      %s42 = sphi 0, %s26
      %s46 = sphi 0, %s46
      %s48 = sphi 0, %s46
      %s49 = sphi 0, %s48
      %s63 = sphi 0, %s49
      %s67 = sphi 0, %s67
      %s69 = sphi 0, %s67
      %s70 = sphi 0, %s69
      %s84 = sphi 0, %s70
      %s90 = sphi 0, %s92
      %s93 = sphi 0, %s90
      %s94 = sphi 0, %s93
      %s110 = sphi 0, %s94
    $region4: #{tpu_custom_call.1} parent=1 // loop_header_branch
      %15 = sbr.rel (%p13) target = $region8
    $region5: #{tpu_custom_call.1} parent=1 // loop_body
      %s17 = ssub.s32 %s12, 1
      %s18 = ssub.s32 %s12, 2
      %s19 = sadd.s32 %s12, 1
      %s20 = ssub.s32 %s12, %s19
      %p21 = scmp.eq.s32.totalorder %s20, 0
      %s23 = sadd.s32 %s22, 1
      %s24 = scalar_select %p21, %s22, %s23
      %p27 = pneg %p21
      %p28 = scmp.eq.s32.totalorder %s12, 1
      %p29 = por %p27, %p28
      %p30 = scmp.ne.s32.totalorder %s22, %s25
      %p31 = scmp.eq.s32.totalorder %s12, 0
      %p32 = por %p30, %p31
      %p33 = scmp.ne.s32.totalorder %s22, %s25
      %p34 = scmp.eq.s32.totalorder %s17, 1
      %p35 = por %p33, %p34
      %p36 = scmp.ne.s32.totalorder %s25, %s26
      %p37 = scmp.eq.s32.totalorder %s17, 0
      %p38 = por %p36, %p37
      %p39 = scmp.ne.s32.totalorder %s25, %s26
      %p40 = scmp.eq.s32.totalorder %s18, 1
      %p41 = por %p39, %p40
      %p43 = scmp.ne.s32.totalorder %s26, %s42
      %p44 = scmp.eq.s32.totalorder %s18, 0
      %p45 = por %p43, %p44
      %s47 = sadd.s32 %s46, 1
      %p50 = scmp.eq.s32.totalorder %s12, 1
      %p51 = scmp.ne.s32.totalorder %s46, %s48
      %p52 = scmp.eq.s32.totalorder %s12, 0
      %p53 = por %p51, %p52
      %p54 = scmp.ne.s32.totalorder %s46, %s48
      %p55 = scmp.eq.s32.totalorder %s17, 1
      %p56 = por %p54, %p55
      %p57 = scmp.ne.s32.totalorder %s48, %s49
      %p58 = scmp.eq.s32.totalorder %s17, 0
      %p59 = por %p57, %p58
      %p60 = scmp.ne.s32.totalorder %s48, %s49
      %p61 = scmp.eq.s32.totalorder %s18, 1
      %p62 = por %p60, %p61
      %p64 = scmp.ne.s32.totalorder %s49, %s63
      %p65 = scmp.eq.s32.totalorder %s18, 0
      %p66 = por %p64, %p65
      %s68 = sadd.s32 %s67, 1
      %p71 = scmp.eq.s32.totalorder %s12, 1
      %p72 = scmp.ne.s32.totalorder %s67, %s69
      %p73 = scmp.eq.s32.totalorder %s12, 0
      %p74 = por %p72, %p73
      %p75 = scmp.ne.s32.totalorder %s67, %s69
      %p76 = scmp.eq.s32.totalorder %s17, 1
      %p77 = por %p75, %p76
      %p78 = scmp.ne.s32.totalorder %s69, %s70
      %p79 = scmp.eq.s32.totalorder %s17, 0
      %p80 = por %p78, %p79
      %p81 = scmp.ne.s32.totalorder %s69, %s70
      %p82 = scmp.eq.s32.totalorder %s18, 1
      %p83 = por %p81, %p82
      %p85 = scmp.ne.s32.totalorder %s70, %s84
      %p86 = scmp.eq.s32.totalorder %s18, 0
      %p87 = por %p85, %p86
      %s88 = ssub.s32 %s12, %s19
      %p89 = scmp.eq.s32.totalorder %s88, 0
      %s91 = sadd.s32 %s90, 1
      %s92 = scalar_select %p89, %s90, %s91
      %p95 = pneg %p89
      %p96 = scmp.eq.s32.totalorder %s12, 1
      %p97 = por %p95, %p96
      %p98 = scmp.ne.s32.totalorder %s90, %s93
      %p99 = scmp.eq.s32.totalorder %s12, 0
      %p100 = por %p98, %p99
      %p101 = scmp.ne.s32.totalorder %s90, %s93
      %p102 = scmp.eq.s32.totalorder %s17, 1
      %p103 = por %p101, %p102
      %p104 = scmp.ne.s32.totalorder %s93, %s94
      %p105 = scmp.eq.s32.totalorder %s17, 0
      %p106 = por %p104, %p105
      %p107 = scmp.ne.s32.totalorder %s93, %s94
      %p108 = scmp.eq.s32.totalorder %s18, 1
      %p109 = por %p107, %p108
      %p111 = scmp.ne.s32.totalorder %s94, %s110
      %p112 = scmp.eq.s32.totalorder %s18, 0
      %p113 = por %p111, %p112
      %p114 = scmp.le.s32.totalorder 1, %s12
      %p115 = scmp.lt.s32.totalorder %s12, 3
      %p116 = pnand %p114, %p115
      %p117 = pneg %p116
      // Predicated region
      $region9: #{tpu_custom_call.1} parent=5 // pred_check
        _
      $region10: #{tpu_custom_call.1} parent=5 // pred_check_branch
        %119 = sbr.rel (%p116) target = $region12
      $region11: #{tpu_custom_call.1} parent=5 // pred_region
        %s120 = ssub.s32 %s12, 1
        // Predicated region
        $region13: #{tpu_custom_call.1} parent=11 // pred_check
          %p121 = pneg %p59
        $region14: #{tpu_custom_call.1} parent=11 // pred_check_branch
          %123 = sbr.rel (%p121) target = $region16
        $region15: #{tpu_custom_call.1} parent=11 // pred_region
          _
        $region16: #{tpu_custom_call.1} parent=11 // pred_fallthru
          _
        // Predicated region
        $region17: #{tpu_custom_call.1} parent=11 // pred_check
          %p124 = pneg %p80
        $region18: #{tpu_custom_call.1} parent=11 // pred_check_branch
          %126 = sbr.rel (%p124) target = $region20
        $region19: #{tpu_custom_call.1} parent=11 // pred_region
          _
        $region20: #{tpu_custom_call.1} parent=11 // pred_fallthru
          _
      $region12: #{tpu_custom_call.1} parent=5 // pred_fallthru
        _
      %p127 = scmp.lt.s32.totalorder %s12, 2
      // Predicated region
      $region21: #{tpu_custom_call.1} parent=5 // pred_check
        %p128 = pneg %p127
      $region22: #{tpu_custom_call.1} parent=5 // pred_check_branch
        %130 = sbr.rel (%p128) target = $region24
      $region23: #{tpu_custom_call.1} parent=5 // pred_region
        // Predicated region
        $region25: #{tpu_custom_call.1} parent=23 // pred_check
          %p131 = pneg %p32
        $region26: #{tpu_custom_call.1} parent=23 // pred_check_branch
          %133 = sbr.rel (%p131) target = $region28
        $region27: #{tpu_custom_call.1} parent=23 // pred_region
          %s134 = smul.u32 128, %s12
          %p135 = scmp.lt.s32.totalorder %s134, 255
          %s136 = scalar_select %p135, %s134, 255
          %s137 = smul.addr %s136, 4
          %s138 = scalar_lea.vmem %s0, %s137
          %s139 = smul.u32 128, %s12
        $region28: #{tpu_custom_call.1} parent=23 // pred_fallthru
          _
      $region24: #{tpu_custom_call.1} parent=5 // pred_fallthru
        _
      %p140 = scmp.le.s32.totalorder 1, %s12
      %p141 = scmp.lt.s32.totalorder %s12, 3
      %p142 = pnand %p140, %p141
      %p143 = pneg %p142
      // Predicated region
      $region29: #{tpu_custom_call.1} parent=5 // pred_check
        _
      $region30: #{tpu_custom_call.1} parent=5 // pred_check_branch
        %145 = sbr.rel (%p142) target = $region32
      $region31: #{tpu_custom_call.1} parent=5 // pred_region
        %s146 = ssub.s32 %s12, 1
        %s147 = smul.u32 128, %s17
        %p148 = scmp.lt.s32.totalorder %s147, 255
        %s149 = scalar_select %p148, %s147, 255
        %s150 = smul.addr %s149, 4
        %s151 = scalar_lea.vmem %s0, %s150
        %p152 = pneg %p38
        %p153 = pneg %p35
        %p154 = pneg %p59
        %p155 = pneg %p56
        %p156 = pneg %p80
        %p157 = pneg %p77
        %p158 = pneg %p106
        %p159 = pneg %p103
        %s160 = sand.u32 %s93, 1
        %s161 = scalar_lea.sflag [#allocation3], %s160
        %s162 = sand.u32 %s93, 1
        %s163 = smul.addr %s162, 1024
        %s164 = scalar_lea.vmem [#allocation2], %s163
        %s165 = smul.u32 128, %s17
        %p166 = scmp.lt.s32.totalorder %s165, 255
        %s167 = scalar_select %p166, %s165, 255
        %s168 = smul.addr %s167, 4
        %s169 = scalar_lea.vmem %s0, %s168
        %s170 = smul.u32 128, %s17
        %s171 = smul.u32 128, %s17
        %v173 = vld [vmem:[%s169] sm:$0xf]
        %v174 = vld [vmem:[%s169 + $0x4] sm:$0xf]
        %v175 = vld [vmem:[%s169 + $0x8] sm:$0xf]
        %v176 = vld [vmem:[%s169 + $0xc] sm:$0xf]
        %v177 = vld [vmem:[%s169 + $0x10] sm:$0xf]
        %v178 = vld [vmem:[%s169 + $0x14] sm:$0xf]
        %v179 = vld [vmem:[%s169 + $0x18] sm:$0xf]
        %v180 = vld [vmem:[%s169 + $0x1c] sm:$0xf]
        %v181 = vld [vmem:[%s169 + $0x20] sm:$0xf]
        %v182 = vld [vmem:[%s169 + $0x24] sm:$0xf]
        %v183 = vld [vmem:[%s169 + $0x28] sm:$0xf]
        %v184 = vld [vmem:[%s169 + $0x2c] sm:$0xf]
        %v185 = vld [vmem:[%s169 + $0x30] sm:$0xf]
        %v186 = vld [vmem:[%s169 + $0x34] sm:$0xf]
        %v187 = vld [vmem:[%s169 + $0x38] sm:$0xf]
        %v188 = vld [vmem:[%s169 + $0x3c] sm:$0xf]
        %v189 = vld [vmem:[%s169 + $0x40] sm:$0xf]
        %v190 = vld [vmem:[%s169 + $0x44] sm:$0xf]
        %v191 = vld [vmem:[%s169 + $0x48] sm:$0xf]
        %v192 = vld [vmem:[%s169 + $0x4c] sm:$0xf]
        %v193 = vld [vmem:[%s169 + $0x50] sm:$0xf]
        %v194 = vld [vmem:[%s169 + $0x54] sm:$0xf]
        %v195 = vld [vmem:[%s169 + $0x58] sm:$0xf]
        %v196 = vld [vmem:[%s169 + $0x5c] sm:$0xf]
        %v197 = vld [vmem:[%s169 + $0x60] sm:$0xf]
        %v198 = vld [vmem:[%s169 + $0x64] sm:$0xf]
        %v199 = vld [vmem:[%s169 + $0x68] sm:$0xf]
        %v200 = vld [vmem:[%s169 + $0x6c] sm:$0xf]
        %v201 = vld [vmem:[%s169 + $0x70] sm:$0xf]
        %v202 = vld [vmem:[%s169 + $0x74] sm:$0xf]
        %v203 = vld [vmem:[%s169 + $0x78] sm:$0xf]
        %v204 = vld [vmem:[%s169 + $0x7c] sm:$0xf]
        %v205 = vld [vmem:[%s169 + $0x80] sm:$0xf]
        %v206 = vld [vmem:[%s169 + $0x84] sm:$0xf]
        %v207 = vld [vmem:[%s169 + $0x88] sm:$0xf]
        %v208 = vld [vmem:[%s169 + $0x8c] sm:$0xf]
        %v209 = vld [vmem:[%s169 + $0x90] sm:$0xf]
        %v210 = vld [vmem:[%s169 + $0x94] sm:$0xf]
        %v211 = vld [vmem:[%s169 + $0x98] sm:$0xf]
        %v212 = vld [vmem:[%s169 + $0x9c] sm:$0xf]
        %v213 = vld [vmem:[%s169 + $0xa0] sm:$0xf]
        %v214 = vld [vmem:[%s169 + $0xa4] sm:$0xf]
        %v215 = vld [vmem:[%s169 + $0xa8] sm:$0xf]
        %v216 = vld [vmem:[%s169 + $0xac] sm:$0xf]
        %v217 = vld [vmem:[%s169 + $0xb0] sm:$0xf]
        %v218 = vld [vmem:[%s169 + $0xb4] sm:$0xf]
        %v219 = vld [vmem:[%s169 + $0xb8] sm:$0xf]
        %v220 = vld [vmem:[%s169 + $0xbc] sm:$0xf]
        %v221 = vld [vmem:[%s169 + $0xc0] sm:$0xf]
        %v222 = vld [vmem:[%s169 + $0xc4] sm:$0xf]
        %v223 = vld [vmem:[%s169 + $0xc8] sm:$0xf]
        %v224 = vld [vmem:[%s169 + $0xcc] sm:$0xf]
        %v225 = vld [vmem:[%s169 + $0xd0] sm:$0xf]
        %v226 = vld [vmem:[%s169 + $0xd4] sm:$0xf]
        %v227 = vld [vmem:[%s169 + $0xd8] sm:$0xf]
        %v228 = vld [vmem:[%s169 + $0xdc] sm:$0xf]
        %v229 = vld [vmem:[%s169 + $0xe0] sm:$0xf]
        %v230 = vld [vmem:[%s169 + $0xe4] sm:$0xf]
        %v231 = vld [vmem:[%s169 + $0xe8] sm:$0xf]
        %v232 = vld [vmem:[%s169 + $0xec] sm:$0xf]
        %v233 = vld [vmem:[%s169 + $0xf0] sm:$0xf]
        %v234 = vld [vmem:[%s169 + $0xf4] sm:$0xf]
        %v235 = vld [vmem:[%s169 + $0xf8] sm:$0xf]
        %v236 = vld [vmem:[%s169 + $0xfc] sm:$0xf]
        %v237 = vld [vmem:[%s169 + $0x100] sm:$0xf]
        %v238 = vld [vmem:[%s169 + $0x104] sm:$0xf]
        %v239 = vld [vmem:[%s169 + $0x108] sm:$0xf]
        %v240 = vld [vmem:[%s169 + $0x10c] sm:$0xf]
        %v241 = vld [vmem:[%s169 + $0x110] sm:$0xf]
        %v242 = vld [vmem:[%s169 + $0x114] sm:$0xf]
        %v243 = vld [vmem:[%s169 + $0x118] sm:$0xf]
        %v244 = vld [vmem:[%s169 + $0x11c] sm:$0xf]
        %v245 = vld [vmem:[%s169 + $0x120] sm:$0xf]
        %v246 = vld [vmem:[%s169 + $0x124] sm:$0xf]
        %v247 = vld [vmem:[%s169 + $0x128] sm:$0xf]
        %v248 = vld [vmem:[%s169 + $0x12c] sm:$0xf]
        %v249 = vld [vmem:[%s169 + $0x130] sm:$0xf]
        %v250 = vld [vmem:[%s169 + $0x134] sm:$0xf]
        %v251 = vld [vmem:[%s169 + $0x138] sm:$0xf]
        %v252 = vld [vmem:[%s169 + $0x13c] sm:$0xf]
        %v253 = vld [vmem:[%s169 + $0x140] sm:$0xf]
        %v254 = vld [vmem:[%s169 + $0x144] sm:$0xf]
        %v255 = vld [vmem:[%s169 + $0x148] sm:$0xf]
        %v256 = vld [vmem:[%s169 + $0x14c] sm:$0xf]
        %v257 = vld [vmem:[%s169 + $0x150] sm:$0xf]
        %v258 = vld [vmem:[%s169 + $0x154] sm:$0xf]
        %v259 = vld [vmem:[%s169 + $0x158] sm:$0xf]
        %v260 = vld [vmem:[%s169 + $0x15c] sm:$0xf]
        %v261 = vld [vmem:[%s169 + $0x160] sm:$0xf]
        %v262 = vld [vmem:[%s169 + $0x164] sm:$0xf]
        %v263 = vld [vmem:[%s169 + $0x168] sm:$0xf]
        %v264 = vld [vmem:[%s169 + $0x16c] sm:$0xf]
        %v265 = vld [vmem:[%s169 + $0x170] sm:$0xf]
        %v266 = vld [vmem:[%s169 + $0x174] sm:$0xf]
        %v267 = vld [vmem:[%s169 + $0x178] sm:$0xf]
        %v268 = vld [vmem:[%s169 + $0x17c] sm:$0xf]
        %v269 = vld [vmem:[%s169 + $0x180] sm:$0xf]
        %v270 = vld [vmem:[%s169 + $0x184] sm:$0xf]
        %v271 = vld [vmem:[%s169 + $0x188] sm:$0xf]
        %v272 = vld [vmem:[%s169 + $0x18c] sm:$0xf]
        %v273 = vld [vmem:[%s169 + $0x190] sm:$0xf]
        %v274 = vld [vmem:[%s169 + $0x194] sm:$0xf]
        %v275 = vld [vmem:[%s169 + $0x198] sm:$0xf]
        %v276 = vld [vmem:[%s169 + $0x19c] sm:$0xf]
        %v277 = vld [vmem:[%s169 + $0x1a0] sm:$0xf]
        %v278 = vld [vmem:[%s169 + $0x1a4] sm:$0xf]
        %v279 = vld [vmem:[%s169 + $0x1a8] sm:$0xf]
        %v280 = vld [vmem:[%s169 + $0x1ac] sm:$0xf]
        %v281 = vld [vmem:[%s169 + $0x1b0] sm:$0xf]
        %v282 = vld [vmem:[%s169 + $0x1b4] sm:$0xf]
        %v283 = vld [vmem:[%s169 + $0x1b8] sm:$0xf]
        %v284 = vld [vmem:[%s169 + $0x1bc] sm:$0xf]
        %v285 = vld [vmem:[%s169 + $0x1c0] sm:$0xf]
        %v286 = vld [vmem:[%s169 + $0x1c4] sm:$0xf]
        %v287 = vld [vmem:[%s169 + $0x1c8] sm:$0xf]
        %v288 = vld [vmem:[%s169 + $0x1cc] sm:$0xf]
        %v289 = vld [vmem:[%s169 + $0x1d0] sm:$0xf]
        %v290 = vld [vmem:[%s169 + $0x1d4] sm:$0xf]
        %v291 = vld [vmem:[%s169 + $0x1d8] sm:$0xf]
        %v292 = vld [vmem:[%s169 + $0x1dc] sm:$0xf]
        %v293 = vld [vmem:[%s169 + $0x1e0] sm:$0xf]
        %v294 = vld [vmem:[%s169 + $0x1e4] sm:$0xf]
        %v295 = vld [vmem:[%s169 + $0x1e8] sm:$0xf]
        %v296 = vld [vmem:[%s169 + $0x1ec] sm:$0xf]
        %v297 = vld [vmem:[%s169 + $0x1f0] sm:$0xf]
        %v298 = vld [vmem:[%s169 + $0x1f4] sm:$0xf]
        %v299 = vld [vmem:[%s169 + $0x1f8] sm:$0xf]
        %v300 = vld [vmem:[%s169 + $0x1fc] sm:$0xf]
        %v301 = vld [vmem:[%s1] sm:$0xf]
        %v302 = vld [vmem:[%s1 + $0x4] sm:$0xf]
        %v303 = vld [vmem:[%s1 + $0x8] sm:$0xf]
        %v304 = vld [vmem:[%s1 + $0xc] sm:$0xf]
        %v305 = vld [vmem:[%s1 + $0x10] sm:$0xf]
        %v306 = vld [vmem:[%s1 + $0x14] sm:$0xf]
        %v307 = vld [vmem:[%s1 + $0x18] sm:$0xf]
        %v308 = vld [vmem:[%s1 + $0x1c] sm:$0xf]
        %v309 = vld [vmem:[%s1 + $0x20] sm:$0xf]
        %v310 = vld [vmem:[%s1 + $0x24] sm:$0xf]
        %v311 = vld [vmem:[%s1 + $0x28] sm:$0xf]
        %v312 = vld [vmem:[%s1 + $0x2c] sm:$0xf]
        %v313 = vld [vmem:[%s1 + $0x30] sm:$0xf]
        %v314 = vld [vmem:[%s1 + $0x34] sm:$0x3]
        %v315 = vld [vmem:[%s2] sm:$0x1]
        %v317 = vlaneseq
        %v318 = vshrl.u32 %v317, 7
        %v319 = vsub.s32 0, %v318
        %v320 = vrot.slane %v315, %v319
        %v450 = vunpack.c.l.b16 %v173
        %v451 = vunpack.c.l.b16 %v174
        %v452 = vunpack.c.l.b16 %v175
        %v453 = vunpack.c.l.b16 %v176
        %v454 = vunpack.c.l.b16 %v177
        %v455 = vunpack.c.l.b16 %v178
        %v456 = vunpack.c.l.b16 %v179
        %v457 = vunpack.c.l.b16 %v180
        %v458 = vunpack.c.l.b16 %v181
        %v459 = vunpack.c.l.b16 %v182
        %v460 = vunpack.c.l.b16 %v183
        %v461 = vunpack.c.l.b16 %v184
        %v462 = vunpack.c.l.b16 %v185
        %v463 = vunpack.c.l.b16 %v186
        %v464 = vunpack.c.l.b16 %v187
        %v465 = vunpack.c.l.b16 %v188
        %v466 = vunpack.c.l.b16 %v189
        %v467 = vunpack.c.l.b16 %v190
        %v468 = vunpack.c.l.b16 %v191
        %v469 = vunpack.c.l.b16 %v192
        %v470 = vunpack.c.l.b16 %v193
        %v471 = vunpack.c.l.b16 %v194
        %v472 = vunpack.c.l.b16 %v195
        %v473 = vunpack.c.l.b16 %v196
        %v474 = vunpack.c.l.b16 %v197
        %v475 = vunpack.c.l.b16 %v198
        %v476 = vunpack.c.l.b16 %v199
        %v477 = vunpack.c.l.b16 %v200
        %v478 = vunpack.c.l.b16 %v201
        %v479 = vunpack.c.l.b16 %v202
        %v480 = vunpack.c.l.b16 %v203
        %v481 = vunpack.c.l.b16 %v204
        %v482 = vunpack.c.l.b16 %v205
        %v483 = vunpack.c.l.b16 %v206
        %v484 = vunpack.c.l.b16 %v207
        %v485 = vunpack.c.l.b16 %v208
        %v486 = vunpack.c.l.b16 %v209
        %v487 = vunpack.c.l.b16 %v210
        %v488 = vunpack.c.l.b16 %v211
        %v489 = vunpack.c.l.b16 %v212
        %v490 = vunpack.c.l.b16 %v213
        %v491 = vunpack.c.l.b16 %v214
        %v492 = vunpack.c.l.b16 %v215
        %v493 = vunpack.c.l.b16 %v216
        %v494 = vunpack.c.l.b16 %v217
        %v495 = vunpack.c.l.b16 %v218
        %v496 = vunpack.c.l.b16 %v219
        %v497 = vunpack.c.l.b16 %v220
        %v498 = vunpack.c.l.b16 %v221
        %v499 = vunpack.c.l.b16 %v222
        %v500 = vunpack.c.l.b16 %v223
        %v501 = vunpack.c.l.b16 %v224
        %v502 = vunpack.c.l.b16 %v225
        %v503 = vunpack.c.l.b16 %v226
        %v504 = vunpack.c.l.b16 %v227
        %v505 = vunpack.c.l.b16 %v228
        %v506 = vunpack.c.l.b16 %v229
        %v507 = vunpack.c.l.b16 %v230
        %v508 = vunpack.c.l.b16 %v231
        %v509 = vunpack.c.l.b16 %v232
        %v510 = vunpack.c.l.b16 %v233
        %v511 = vunpack.c.l.b16 %v234
        %v512 = vunpack.c.l.b16 %v235
        %v513 = vunpack.c.l.b16 %v236
        %v514 = vunpack.c.l.b16 %v237
        %v515 = vunpack.c.l.b16 %v238
        %v516 = vunpack.c.l.b16 %v239
        %v517 = vunpack.c.l.b16 %v240
        %v518 = vunpack.c.l.b16 %v241
        %v519 = vunpack.c.l.b16 %v242
        %v520 = vunpack.c.l.b16 %v243
        %v521 = vunpack.c.l.b16 %v244
        %v522 = vunpack.c.l.b16 %v245
        %v523 = vunpack.c.l.b16 %v246
        %v524 = vunpack.c.l.b16 %v247
        %v525 = vunpack.c.l.b16 %v248
        %v526 = vunpack.c.l.b16 %v249
        %v527 = vunpack.c.l.b16 %v250
        %v528 = vunpack.c.l.b16 %v251
        %v529 = vunpack.c.l.b16 %v252
        %v530 = vunpack.c.l.b16 %v253
        %v531 = vunpack.c.l.b16 %v254
        %v532 = vunpack.c.l.b16 %v255
        %v533 = vunpack.c.l.b16 %v256
        %v534 = vunpack.c.l.b16 %v257
        %v535 = vunpack.c.l.b16 %v258
        %v536 = vunpack.c.l.b16 %v259
        %v537 = vunpack.c.l.b16 %v260
        %v538 = vunpack.c.l.b16 %v261
        %v539 = vunpack.c.l.b16 %v262
        %v540 = vunpack.c.l.b16 %v263
        %v541 = vunpack.c.l.b16 %v264
        %v542 = vunpack.c.l.b16 %v265
        %v543 = vunpack.c.l.b16 %v266
        %v544 = vunpack.c.l.b16 %v267
        %v545 = vunpack.c.l.b16 %v268
        %v546 = vunpack.c.l.b16 %v269
        %v547 = vunpack.c.l.b16 %v270
        %v548 = vunpack.c.l.b16 %v271
        %v549 = vunpack.c.l.b16 %v272
        %v550 = vunpack.c.l.b16 %v273
        %v551 = vunpack.c.l.b16 %v274
        %v552 = vunpack.c.l.b16 %v275
        %v553 = vunpack.c.l.b16 %v276
        %v554 = vunpack.c.l.b16 %v277
        %v555 = vunpack.c.l.b16 %v278
        %v556 = vunpack.c.l.b16 %v279
        %v557 = vunpack.c.l.b16 %v280
        %v558 = vunpack.c.l.b16 %v281
        %v559 = vunpack.c.l.b16 %v282
        %v560 = vunpack.c.l.b16 %v283
        %v561 = vunpack.c.l.b16 %v284
        %v562 = vunpack.c.l.b16 %v285
        %v563 = vunpack.c.l.b16 %v286
        %v564 = vunpack.c.l.b16 %v287
        %v565 = vunpack.c.l.b16 %v288
        %v566 = vunpack.c.l.b16 %v289
        %v567 = vunpack.c.l.b16 %v290
        %v568 = vunpack.c.l.b16 %v291
        %v569 = vunpack.c.l.b16 %v292
        %v570 = vunpack.c.l.b16 %v293
        %v571 = vunpack.c.l.b16 %v294
        %v572 = vunpack.c.l.b16 %v295
        %v573 = vunpack.c.l.b16 %v296
        %v574 = vunpack.c.l.b16 %v297
        %v575 = vunpack.c.l.b16 %v298
        %v576 = vunpack.c.l.b16 %v299
        %v577 = vunpack.c.l.b16 %v300
        %v578 = vpack.c.b16 %v451, %v450
        %v579 = vpack.c.b16 %v453, %v452
        %v580 = vpack.c.b16 %v455, %v454
        %v581 = vpack.c.b16 %v457, %v456
        %v582 = vpack.c.b16 %v459, %v458
        %v583 = vpack.c.b16 %v461, %v460
        %v584 = vpack.c.b16 %v463, %v462
        %v585 = vpack.c.b16 %v465, %v464
        %v586 = vpack.c.b16 %v467, %v466
        %v587 = vpack.c.b16 %v469, %v468
        %v588 = vpack.c.b16 %v471, %v470
        %v589 = vpack.c.b16 %v473, %v472
        %v590 = vpack.c.b16 %v475, %v474
        %v591 = vpack.c.b16 %v477, %v476
        %v592 = vpack.c.b16 %v479, %v478
        %v593 = vpack.c.b16 %v481, %v480
        %v594 = vpack.c.b16 %v483, %v482
        %v595 = vpack.c.b16 %v485, %v484
        %v596 = vpack.c.b16 %v487, %v486
        %v597 = vpack.c.b16 %v489, %v488
        %v598 = vpack.c.b16 %v491, %v490
        %v599 = vpack.c.b16 %v493, %v492
        %v600 = vpack.c.b16 %v495, %v494
        %v601 = vpack.c.b16 %v497, %v496
        %v602 = vpack.c.b16 %v499, %v498
        %v603 = vpack.c.b16 %v501, %v500
        %v604 = vpack.c.b16 %v503, %v502
        %v605 = vpack.c.b16 %v505, %v504
        %v606 = vpack.c.b16 %v507, %v506
        %v607 = vpack.c.b16 %v509, %v508
        %v608 = vpack.c.b16 %v511, %v510
        %v609 = vpack.c.b16 %v513, %v512
        %v610 = vpack.c.b16 %v515, %v514
        %v611 = vpack.c.b16 %v517, %v516
        %v612 = vpack.c.b16 %v519, %v518
        %v613 = vpack.c.b16 %v521, %v520
        %v614 = vpack.c.b16 %v523, %v522
        %v615 = vpack.c.b16 %v525, %v524
        %v616 = vpack.c.b16 %v527, %v526
        %v617 = vpack.c.b16 %v529, %v528
        %v618 = vpack.c.b16 %v531, %v530
        %v619 = vpack.c.b16 %v533, %v532
        %v620 = vpack.c.b16 %v535, %v534
        %v621 = vpack.c.b16 %v537, %v536
        %v622 = vpack.c.b16 %v539, %v538
        %v623 = vpack.c.b16 %v541, %v540
        %v624 = vpack.c.b16 %v543, %v542
        %v625 = vpack.c.b16 %v545, %v544
        %v626 = vpack.c.b16 %v547, %v546
        %v627 = vpack.c.b16 %v549, %v548
        %v628 = vpack.c.b16 %v551, %v550
        %v629 = vpack.c.b16 %v553, %v552
        %v630 = vpack.c.b16 %v555, %v554
        %v631 = vpack.c.b16 %v557, %v556
        %v632 = vpack.c.b16 %v559, %v558
        %v633 = vpack.c.b16 %v561, %v560
        %v634 = vpack.c.b16 %v563, %v562
        %v635 = vpack.c.b16 %v565, %v564
        %v636 = vpack.c.b16 %v567, %v566
        %v637 = vpack.c.b16 %v569, %v568
        %v638 = vpack.c.b16 %v571, %v570
        %v639 = vpack.c.b16 %v573, %v572
        %v640 = vpack.c.b16 %v575, %v574
        %v641 = vpack.c.b16 %v577, %v576
        %v656 = vunpack.c.l.b16 %v301
        %v657 = vunpack.c.l.b16 %v302
        %v658 = vunpack.c.l.b16 %v303
        %v659 = vunpack.c.l.b16 %v304
        %v660 = vunpack.c.l.b16 %v305
        %v661 = vunpack.c.l.b16 %v306
        %v662 = vunpack.c.l.b16 %v307
        %v663 = vunpack.c.l.b16 %v308
        %v664 = vunpack.c.l.b16 %v309
        %v665 = vunpack.c.l.b16 %v310
        %v666 = vunpack.c.l.b16 %v311
        %v667 = vunpack.c.l.b16 %v312
        %v668 = vunpack.c.l.b16 %v313
        %v669 = vunpack.c.l.b16 %v314
        %v670 = vpack.c.b16 %v657, %v656
        %v671 = vpack.c.b16 %v659, %v658
        %v672 = vpack.c.b16 %v661, %v660
        %v673 = vpack.c.b16 %v663, %v662
        %v674 = vpack.c.b16 %v665, %v664
        %v675 = vpack.c.b16 %v667, %v666
        %v676 = vpack.c.b16 %v669, %v668
        %vm683 = vcmask 883712
        %v685 = vsel %vm683, %v578, 0
        %v688 = vsel %vm683, %v579, 0
        %v691 = vsel %vm683, %v580, 0
        %v694 = vsel %vm683, %v581, 0
        %v697 = vsel %vm683, %v582, 0
        %v700 = vsel %vm683, %v583, 0
        %v703 = vsel %vm683, %v584, 0
        %v706 = vsel %vm683, %v585, 0
        %v709 = vsel %vm683, %v586, 0
        %v712 = vsel %vm683, %v587, 0
        %v715 = vsel %vm683, %v588, 0
        %v718 = vsel %vm683, %v589, 0
        %v721 = vsel %vm683, %v590, 0
        %v724 = vsel %vm683, %v591, 0
        %v727 = vsel %vm683, %v592, 0
        %v730 = vsel %vm683, %v593, 0
        %v733 = vsel %vm683, %v594, 0
        %v736 = vsel %vm683, %v595, 0
        %v739 = vsel %vm683, %v596, 0
        %v742 = vsel %vm683, %v597, 0
        %v745 = vsel %vm683, %v598, 0
        %v748 = vsel %vm683, %v599, 0
        %v751 = vsel %vm683, %v600, 0
        %v754 = vsel %vm683, %v601, 0
        %v757 = vsel %vm683, %v602, 0
        %v760 = vsel %vm683, %v603, 0
        %v763 = vsel %vm683, %v604, 0
        %v766 = vsel %vm683, %v605, 0
        %v769 = vsel %vm683, %v606, 0
        %v772 = vsel %vm683, %v607, 0
        %v775 = vsel %vm683, %v608, 0
        %v778 = vsel %vm683, %v609, 0
        %v781 = vsel %vm683, %v610, 0
        %v784 = vsel %vm683, %v611, 0
        %v787 = vsel %vm683, %v612, 0
        %v790 = vsel %vm683, %v613, 0
        %v793 = vsel %vm683, %v614, 0
        %v796 = vsel %vm683, %v615, 0
        %v799 = vsel %vm683, %v616, 0
        %v802 = vsel %vm683, %v617, 0
        %v805 = vsel %vm683, %v618, 0
        %v808 = vsel %vm683, %v619, 0
        %v811 = vsel %vm683, %v620, 0
        %v814 = vsel %vm683, %v621, 0
        %v817 = vsel %vm683, %v622, 0
        %v820 = vsel %vm683, %v623, 0
        %v823 = vsel %vm683, %v624, 0
        %v826 = vsel %vm683, %v625, 0
        %v829 = vsel %vm683, %v626, 0
        %v832 = vsel %vm683, %v627, 0
        %v835 = vsel %vm683, %v628, 0
        %v838 = vsel %vm683, %v629, 0
        %v841 = vsel %vm683, %v630, 0
        %v844 = vsel %vm683, %v631, 0
        %v847 = vsel %vm683, %v632, 0
        %v850 = vsel %vm683, %v633, 0
        %v853 = vsel %vm683, %v634, 0
        %v856 = vsel %vm683, %v635, 0
        %v859 = vsel %vm683, %v636, 0
        %v862 = vsel %vm683, %v637, 0
        %v865 = vsel %vm683, %v638, 0
        %v868 = vsel %vm683, %v639, 0
        %v871 = vsel %vm683, %v640, 0
        %v874 = vsel %vm683, %v641, 0
        %vm876 = vcmask 1045504
        %v878 = vsel %vm876, %v676, 0
        %880 = vmatprep.subr.bf16.mxu0 0
        %881 = vmatpush1.bf16.msra.mxu0 %v670
        %882 = vmatprep.subr.bf16.mxu0 0
        %883 = vmatpush1.bf16.msra.mxu0 %v671
        %884 = vmatprep.subr.bf16.mxu0 0
        %885 = vmatpush1.bf16.msra.mxu0 %v672
        %886 = vmatprep.subr.bf16.mxu0 0
        %887 = vmatpush1.bf16.msra.mxu0 %v673
        %888 = vmatprep.subr.bf16.mxu0 0
        %889 = vmatpush1.bf16.msra.mxu0 %v674
        %890 = vmatprep.subr.bf16.mxu0 0
        %891 = vmatpush1.bf16.msra.mxu0 %v675
        %892 = vmatprep.subr.bf16.mxu0 0
        %893 = vmatpush1.bf16.msra.mxu0 %v878
        %894 = vmatprep.subr.bf16.mxu0 0
        %895 = vmatpush1.bf16.msra.mxu0 0
        %896 = vmatprep.subr.bf16.mxu0 0
        %897 = vmatpush1.bf16.msra.mxu0 0
        %898 = vmatprep.subr.bf16.mxu0 0
        %899 = vmatpush1.bf16.msra.mxu0 0
        %900 = vmatprep.subr.bf16.mxu0 0
        %901 = vmatpush1.bf16.msra.mxu0 0
        %902 = vmatprep.subr.bf16.mxu0 0
        %903 = vmatpush1.bf16.msra.mxu0 0
        %904 = vmatprep.subr.bf16.mxu0 0
        %905 = vmatpush1.bf16.msra.mxu0 0
        %906 = vmatprep.subr.bf16.mxu0 0
        %907 = vmatpush1.bf16.msra.mxu0 0
        %908 = vmatprep.subr.bf16.mxu0 0
        %909 = vmatpush1.bf16.msra.mxu0 0
        %910 = vmatprep.subr.bf16.mxu0 0
        %911 = vmatpush1.bf16.msra.mxu0 0
        %912 = vmatprep.mubr.bf16.mxu0 0
        %913 = vmatmul.mubr.bf16.gmra.mrb[0].mxu0 %v685
        %v914 = vpop.f32.mrb[0].mxu0
        %v915 = vadd.f32 %v320, %v914
        %v916 = vpop.f32.mrb[0].mxu0
        %v917 = vpop.f32.mrb[0].mxu0
        %v918 = vadd.f32 %v320, %v917
        %v919 = vpop.f32.mrb[0].mxu0
        %920 = vmatprep.mubr.bf16.mxu0 0
        %921 = vmatmul.mubr.bf16.gmra.mrb[0].mxu0 %v688
        %v922 = vpop.f32.mrb[0].mxu0
        %v923 = vadd.f32 %v320, %v922
        %v924 = vpop.f32.mrb[0].mxu0
        %v925 = vpop.f32.mrb[0].mxu0
        %v926 = vadd.f32 %v320, %v925
        %v927 = vpop.f32.mrb[0].mxu0
        %928 = vmatprep.mubr.bf16.mxu0 0
        %929 = vmatmul.mubr.bf16.gmra.mrb[0].mxu0 %v691
        %v930 = vpop.f32.mrb[0].mxu0
        %v931 = vadd.f32 %v320, %v930
        %v932 = vpop.f32.mrb[0].mxu0
        %v933 = vpop.f32.mrb[0].mxu0
        %v934 = vadd.f32 %v320, %v933
        %v935 = vpop.f32.mrb[0].mxu0
        %936 = vmatprep.mubr.bf16.mxu0 0
        %937 = vmatmul.mubr.bf16.gmra.mrb[0].mxu0 %v694
        %v938 = vpop.f32.mrb[0].mxu0
        %v939 = vadd.f32 %v320, %v938
        %v940 = vpop.f32.mrb[0].mxu0
        %v941 = vpop.f32.mrb[0].mxu0
        %v942 = vadd.f32 %v320, %v941
        %v943 = vpop.f32.mrb[0].mxu0
        %944 = vmatprep.mubr.bf16.mxu0 0
        %945 = vmatmul.mubr.bf16.gmra.mrb[0].mxu0 %v697
        %v946 = vpop.f32.mrb[0].mxu0
        %v947 = vadd.f32 %v320, %v946
        %v948 = vpop.f32.mrb[0].mxu0
        %v949 = vpop.f32.mrb[0].mxu0
        %v950 = vadd.f32 %v320, %v949
        %v951 = vpop.f32.mrb[0].mxu0
        %952 = vmatprep.mubr.bf16.mxu0 0
        %953 = vmatmul.mubr.bf16.gmra.mrb[0].mxu0 %v700
        %v954 = vpop.f32.mrb[0].mxu0
        %v955 = vadd.f32 %v320, %v954
        %v956 = vpop.f32.mrb[0].mxu0
        %v957 = vpop.f32.mrb[0].mxu0
        %v958 = vadd.f32 %v320, %v957
        %v959 = vpop.f32.mrb[0].mxu0
        %960 = vmatprep.mubr.bf16.mxu0 0
        %961 = vmatmul.mubr.bf16.gmra.mrb[0].mxu0 %v703
        %v962 = vpop.f32.mrb[0].mxu0
        %v963 = vadd.f32 %v320, %v962
        %v964 = vpop.f32.mrb[0].mxu0
        %v965 = vpop.f32.mrb[0].mxu0
        %v966 = vadd.f32 %v320, %v965
        %v967 = vpop.f32.mrb[0].mxu0
        %968 = vmatprep.mubr.bf16.mxu0 0
        %969 = vmatmul.mubr.bf16.gmra.mrb[0].mxu0 %v706
        %v970 = vpop.f32.mrb[0].mxu0
        %v971 = vadd.f32 %v320, %v970
        %v972 = vpop.f32.mrb[0].mxu0
        %v973 = vpop.f32.mrb[0].mxu0
        %v974 = vadd.f32 %v320, %v973
        %v975 = vpop.f32.mrb[0].mxu0
        %976 = vmatprep.mubr.bf16.mxu0 0
        %977 = vmatmul.mubr.bf16.gmra.mrb[0].mxu0 %v709
        %v978 = vpop.f32.mrb[0].mxu0
        %v979 = vadd.f32 %v320, %v978
        %v980 = vpop.f32.mrb[0].mxu0
        %v981 = vpop.f32.mrb[0].mxu0
        %v982 = vadd.f32 %v320, %v981
        %v983 = vpop.f32.mrb[0].mxu0
        %984 = vmatprep.mubr.bf16.mxu0 0
        %985 = vmatmul.mubr.bf16.gmra.mrb[0].mxu0 %v712
        %v986 = vpop.f32.mrb[0].mxu0
        %v987 = vadd.f32 %v320, %v986
        %v988 = vpop.f32.mrb[0].mxu0
        %v989 = vpop.f32.mrb[0].mxu0
        %v990 = vadd.f32 %v320, %v989
        %v991 = vpop.f32.mrb[0].mxu0
        %992 = vmatprep.mubr.bf16.mxu0 0
        %993 = vmatmul.mubr.bf16.gmra.mrb[0].mxu0 %v715
        %v994 = vpop.f32.mrb[0].mxu0
        %v995 = vadd.f32 %v320, %v994
        %v996 = vpop.f32.mrb[0].mxu0
        %v997 = vpop.f32.mrb[0].mxu0
        %v998 = vadd.f32 %v320, %v997
        %v999 = vpop.f32.mrb[0].mxu0
        %1000 = vmatprep.mubr.bf16.mxu0 0
        %1001 = vmatmul.mubr.bf16.gmra.mrb[0].mxu0 %v718
        %v1002 = vpop.f32.mrb[0].mxu0
        %v1003 = vadd.f32 %v320, %v1002
        %v1004 = vpop.f32.mrb[0].mxu0
        %v1005 = vpop.f32.mrb[0].mxu0
        %v1006 = vadd.f32 %v320, %v1005
        %v1007 = vpop.f32.mrb[0].mxu0
        %1008 = vmatprep.mubr.bf16.mxu0 0
        %1009 = vmatmul.mubr.bf16.gmra.mrb[0].mxu0 %v721
        %v1010 = vpop.f32.mrb[0].mxu0
        %v1011 = vadd.f32 %v320, %v1010
        %v1012 = vpop.f32.mrb[0].mxu0
        %v1013 = vpop.f32.mrb[0].mxu0
        %v1014 = vadd.f32 %v320, %v1013
        %v1015 = vpop.f32.mrb[0].mxu0
        %1016 = vmatprep.mubr.bf16.mxu0 0
        %1017 = vmatmul.mubr.bf16.gmra.mrb[0].mxu0 %v724
        %v1018 = vpop.f32.mrb[0].mxu0
        %v1019 = vadd.f32 %v320, %v1018
        %v1020 = vpop.f32.mrb[0].mxu0
        %v1021 = vpop.f32.mrb[0].mxu0
        %v1022 = vadd.f32 %v320, %v1021
        %v1023 = vpop.f32.mrb[0].mxu0
        %1024 = vmatprep.mubr.bf16.mxu0 0
        %1025 = vmatmul.mubr.bf16.gmra.mrb[0].mxu0 %v727
        %v1026 = vpop.f32.mrb[0].mxu0
        %v1027 = vadd.f32 %v320, %v1026
        %v1028 = vpop.f32.mrb[0].mxu0
        %v1029 = vpop.f32.mrb[0].mxu0
        %v1030 = vadd.f32 %v320, %v1029
        %v1031 = vpop.f32.mrb[0].mxu0
        %1032 = vmatprep.mubr.bf16.mxu0 0
        %1033 = vmatmul.mubr.bf16.gmra.mrb[0].mxu0 %v730
        %v1034 = vpop.f32.mrb[0].mxu0
        %v1035 = vadd.f32 %v320, %v1034
        %v1036 = vpop.f32.mrb[0].mxu0
        %v1037 = vpop.f32.mrb[0].mxu0
        %v1038 = vadd.f32 %v320, %v1037
        %v1039 = vpop.f32.mrb[0].mxu0
        %1040 = vmatprep.mubr.bf16.mxu0 0
        %1041 = vmatmul.mubr.bf16.gmra.mrb[0].mxu0 %v733
        %v1042 = vpop.f32.mrb[0].mxu0
        %v1043 = vadd.f32 %v320, %v1042
        %v1044 = vpop.f32.mrb[0].mxu0
        %v1045 = vpop.f32.mrb[0].mxu0
        %v1046 = vadd.f32 %v320, %v1045
        %v1047 = vpop.f32.mrb[0].mxu0
        %1048 = vmatprep.mubr.bf16.mxu0 0
        %1049 = vmatmul.mubr.bf16.gmra.mrb[0].mxu0 %v736
        %v1050 = vpop.f32.mrb[0].mxu0
        %v1051 = vadd.f32 %v320, %v1050
        %v1052 = vpop.f32.mrb[0].mxu0
        %v1053 = vpop.f32.mrb[0].mxu0
        %v1054 = vadd.f32 %v320, %v1053
        %v1055 = vpop.f32.mrb[0].mxu0
        %1056 = vmatprep.mubr.bf16.mxu0 0
        %1057 = vmatmul.mubr.bf16.gmra.mrb[0].mxu0 %v739
        %v1058 = vpop.f32.mrb[0].mxu0
        %v1059 = vadd.f32 %v320, %v1058
        %v1060 = vpop.f32.mrb[0].mxu0
        %v1061 = vpop.f32.mrb[0].mxu0
        %v1062 = vadd.f32 %v320, %v1061
        %v1063 = vpop.f32.mrb[0].mxu0
        %1064 = vmatprep.mubr.bf16.mxu0 0
        %1065 = vmatmul.mubr.bf16.gmra.mrb[0].mxu0 %v742
        %v1066 = vpop.f32.mrb[0].mxu0
        %v1067 = vadd.f32 %v320, %v1066
        %v1068 = vpop.f32.mrb[0].mxu0
        %v1069 = vpop.f32.mrb[0].mxu0
        %v1070 = vadd.f32 %v320, %v1069
        %v1071 = vpop.f32.mrb[0].mxu0
        %1072 = vmatprep.mubr.bf16.mxu0 0
        %1073 = vmatmul.mubr.bf16.gmra.mrb[0].mxu0 %v745
        %v1074 = vpop.f32.mrb[0].mxu0
        %v1075 = vadd.f32 %v320, %v1074
        %v1076 = vpop.f32.mrb[0].mxu0
        %v1077 = vpop.f32.mrb[0].mxu0
        %v1078 = vadd.f32 %v320, %v1077
        %v1079 = vpop.f32.mrb[0].mxu0
        %1080 = vmatprep.mubr.bf16.mxu0 0
        %1081 = vmatmul.mubr.bf16.gmra.mrb[0].mxu0 %v748
        %v1082 = vpop.f32.mrb[0].mxu0
        %v1083 = vadd.f32 %v320, %v1082
        %v1084 = vpop.f32.mrb[0].mxu0
        %v1085 = vpop.f32.mrb[0].mxu0
        %v1086 = vadd.f32 %v320, %v1085
        %v1087 = vpop.f32.mrb[0].mxu0
        %1088 = vmatprep.mubr.bf16.mxu0 0
        %1089 = vmatmul.mubr.bf16.gmra.mrb[0].mxu0 %v751
        %v1090 = vpop.f32.mrb[0].mxu0
        %v1091 = vadd.f32 %v320, %v1090
        %v1092 = vpop.f32.mrb[0].mxu0
        %v1093 = vpop.f32.mrb[0].mxu0
        %v1094 = vadd.f32 %v320, %v1093
        %v1095 = vpop.f32.mrb[0].mxu0
        %1096 = vmatprep.mubr.bf16.mxu0 0
        %1097 = vmatmul.mubr.bf16.gmra.mrb[0].mxu0 %v754
        %v1098 = vpop.f32.mrb[0].mxu0
        %v1099 = vadd.f32 %v320, %v1098
        %v1100 = vpop.f32.mrb[0].mxu0
        %v1101 = vpop.f32.mrb[0].mxu0
        %v1102 = vadd.f32 %v320, %v1101
        %v1103 = vpop.f32.mrb[0].mxu0
        %1104 = vmatprep.mubr.bf16.mxu0 0
        %1105 = vmatmul.mubr.bf16.gmra.mrb[0].mxu0 %v757
        %v1106 = vpop.f32.mrb[0].mxu0
        %v1107 = vadd.f32 %v320, %v1106
        %v1108 = vpop.f32.mrb[0].mxu0
        %v1109 = vpop.f32.mrb[0].mxu0
        %v1110 = vadd.f32 %v320, %v1109
        %v1111 = vpop.f32.mrb[0].mxu0
        %1112 = vmatprep.mubr.bf16.mxu0 0
        %1113 = vmatmul.mubr.bf16.gmra.mrb[0].mxu0 %v760
        %v1114 = vpop.f32.mrb[0].mxu0
        %v1115 = vadd.f32 %v320, %v1114
        %v1116 = vpop.f32.mrb[0].mxu0
        %v1117 = vpop.f32.mrb[0].mxu0
        %v1118 = vadd.f32 %v320, %v1117
        %v1119 = vpop.f32.mrb[0].mxu0
        %1120 = vmatprep.mubr.bf16.mxu0 0
        %1121 = vmatmul.mubr.bf16.gmra.mrb[0].mxu0 %v763
        %v1122 = vpop.f32.mrb[0].mxu0
        %v1123 = vadd.f32 %v320, %v1122
        %v1124 = vpop.f32.mrb[0].mxu0
        %v1125 = vpop.f32.mrb[0].mxu0
        %v1126 = vadd.f32 %v320, %v1125
        %v1127 = vpop.f32.mrb[0].mxu0
        %1128 = vmatprep.mubr.bf16.mxu0 0
        %1129 = vmatmul.mubr.bf16.gmra.mrb[0].mxu0 %v766
        %v1130 = vpop.f32.mrb[0].mxu0
        %v1131 = vadd.f32 %v320, %v1130
        %v1132 = vpop.f32.mrb[0].mxu0
        %v1133 = vpop.f32.mrb[0].mxu0
        %v1134 = vadd.f32 %v320, %v1133
        %v1135 = vpop.f32.mrb[0].mxu0
        %1136 = vmatprep.mubr.bf16.mxu0 0
        %1137 = vmatmul.mubr.bf16.gmra.mrb[0].mxu0 %v769
        %v1138 = vpop.f32.mrb[0].mxu0
        %v1139 = vadd.f32 %v320, %v1138
        %v1140 = vpop.f32.mrb[0].mxu0
        %v1141 = vpop.f32.mrb[0].mxu0
        %v1142 = vadd.f32 %v320, %v1141
        %v1143 = vpop.f32.mrb[0].mxu0
        %1144 = vmatprep.mubr.bf16.mxu0 0
        %1145 = vmatmul.mubr.bf16.gmra.mrb[0].mxu0 %v772
        %v1146 = vpop.f32.mrb[0].mxu0
        %v1147 = vadd.f32 %v320, %v1146
        %v1148 = vpop.f32.mrb[0].mxu0
        %v1149 = vpop.f32.mrb[0].mxu0
        %v1150 = vadd.f32 %v320, %v1149
        %v1151 = vpop.f32.mrb[0].mxu0
        %1152 = vmatprep.mubr.bf16.mxu0 0
        %1153 = vmatmul.mubr.bf16.gmra.mrb[0].mxu0 %v775
        %v1154 = vpop.f32.mrb[0].mxu0
        %v1155 = vadd.f32 %v320, %v1154
        %v1156 = vpop.f32.mrb[0].mxu0
        %v1157 = vpop.f32.mrb[0].mxu0
        %v1158 = vadd.f32 %v320, %v1157
        %v1159 = vpop.f32.mrb[0].mxu0
        %1160 = vmatprep.mubr.bf16.mxu0 0
        %1161 = vmatmul.mubr.bf16.gmra.mrb[0].mxu0 %v778
        %v1162 = vpop.f32.mrb[0].mxu0
        %v1163 = vadd.f32 %v320, %v1162
        %v1164 = vpop.f32.mrb[0].mxu0
        %v1165 = vpop.f32.mrb[0].mxu0
        %v1166 = vadd.f32 %v320, %v1165
        %v1167 = vpop.f32.mrb[0].mxu0
        %1168 = vmatprep.mubr.bf16.mxu0 0
        %1169 = vmatmul.mubr.bf16.gmra.mrb[0].mxu0 %v781
        %v1170 = vpop.f32.mrb[0].mxu0
        %v1171 = vadd.f32 %v320, %v1170
        %v1172 = vpop.f32.mrb[0].mxu0
        %v1173 = vpop.f32.mrb[0].mxu0
        %v1174 = vadd.f32 %v320, %v1173
        %v1175 = vpop.f32.mrb[0].mxu0
        %1176 = vmatprep.mubr.bf16.mxu0 0
        %1177 = vmatmul.mubr.bf16.gmra.mrb[0].mxu0 %v784
        %v1178 = vpop.f32.mrb[0].mxu0
        %v1179 = vadd.f32 %v320, %v1178
        %v1180 = vpop.f32.mrb[0].mxu0
        %v1181 = vpop.f32.mrb[0].mxu0
        %v1182 = vadd.f32 %v320, %v1181
        %v1183 = vpop.f32.mrb[0].mxu0
        %1184 = vmatprep.mubr.bf16.mxu0 0
        %1185 = vmatmul.mubr.bf16.gmra.mrb[0].mxu0 %v787
        %v1186 = vpop.f32.mrb[0].mxu0
        %v1187 = vadd.f32 %v320, %v1186
        %v1188 = vpop.f32.mrb[0].mxu0
        %v1189 = vpop.f32.mrb[0].mxu0
        %v1190 = vadd.f32 %v320, %v1189
        %v1191 = vpop.f32.mrb[0].mxu0
        %1192 = vmatprep.mubr.bf16.mxu0 0
        %1193 = vmatmul.mubr.bf16.gmra.mrb[0].mxu0 %v790
        %v1194 = vpop.f32.mrb[0].mxu0
        %v1195 = vadd.f32 %v320, %v1194
        %v1196 = vpop.f32.mrb[0].mxu0
        %v1197 = vpop.f32.mrb[0].mxu0
        %v1198 = vadd.f32 %v320, %v1197
        %v1199 = vpop.f32.mrb[0].mxu0
        %1200 = vmatprep.mubr.bf16.mxu0 0
        %1201 = vmatmul.mubr.bf16.gmra.mrb[0].mxu0 %v793
        %v1202 = vpop.f32.mrb[0].mxu0
        %v1203 = vadd.f32 %v320, %v1202
        %v1204 = vpop.f32.mrb[0].mxu0
        %v1205 = vpop.f32.mrb[0].mxu0
        %v1206 = vadd.f32 %v320, %v1205
        %v1207 = vpop.f32.mrb[0].mxu0
        %1208 = vmatprep.mubr.bf16.mxu0 0
        %1209 = vmatmul.mubr.bf16.gmra.mrb[0].mxu0 %v796
        %v1210 = vpop.f32.mrb[0].mxu0
        %v1211 = vadd.f32 %v320, %v1210
        %v1212 = vpop.f32.mrb[0].mxu0
        %v1213 = vpop.f32.mrb[0].mxu0
        %v1214 = vadd.f32 %v320, %v1213
        %v1215 = vpop.f32.mrb[0].mxu0
        %1216 = vmatprep.mubr.bf16.mxu0 0
        %1217 = vmatmul.mubr.bf16.gmra.mrb[0].mxu0 %v799
        %v1218 = vpop.f32.mrb[0].mxu0
        %v1219 = vadd.f32 %v320, %v1218
        %v1220 = vpop.f32.mrb[0].mxu0
        %v1221 = vpop.f32.mrb[0].mxu0
        %v1222 = vadd.f32 %v320, %v1221
        %v1223 = vpop.f32.mrb[0].mxu0
        %1224 = vmatprep.mubr.bf16.mxu0 0
        %1225 = vmatmul.mubr.bf16.gmra.mrb[0].mxu0 %v802
        %v1226 = vpop.f32.mrb[0].mxu0
        %v1227 = vadd.f32 %v320, %v1226
        %v1228 = vpop.f32.mrb[0].mxu0
        %v1229 = vpop.f32.mrb[0].mxu0
        %v1230 = vadd.f32 %v320, %v1229
        %v1231 = vpop.f32.mrb[0].mxu0
        %1232 = vmatprep.mubr.bf16.mxu0 0
        %1233 = vmatmul.mubr.bf16.gmra.mrb[0].mxu0 %v805
        %v1234 = vpop.f32.mrb[0].mxu0
        %v1235 = vadd.f32 %v320, %v1234
        %v1236 = vpop.f32.mrb[0].mxu0
        %v1237 = vpop.f32.mrb[0].mxu0
        %v1238 = vadd.f32 %v320, %v1237
        %v1239 = vpop.f32.mrb[0].mxu0
        %1240 = vmatprep.mubr.bf16.mxu0 0
        %1241 = vmatmul.mubr.bf16.gmra.mrb[0].mxu0 %v808
        %v1242 = vpop.f32.mrb[0].mxu0
        %v1243 = vadd.f32 %v320, %v1242
        %v1244 = vpop.f32.mrb[0].mxu0
        %v1245 = vpop.f32.mrb[0].mxu0
        %v1246 = vadd.f32 %v320, %v1245
        %v1247 = vpop.f32.mrb[0].mxu0
        %1248 = vmatprep.mubr.bf16.mxu0 0
        %1249 = vmatmul.mubr.bf16.gmra.mrb[0].mxu0 %v811
        %v1250 = vpop.f32.mrb[0].mxu0
        %v1251 = vadd.f32 %v320, %v1250
        %v1252 = vpop.f32.mrb[0].mxu0
        %v1253 = vpop.f32.mrb[0].mxu0
        %v1254 = vadd.f32 %v320, %v1253
        %v1255 = vpop.f32.mrb[0].mxu0
        %1256 = vmatprep.mubr.bf16.mxu0 0
        %1257 = vmatmul.mubr.bf16.gmra.mrb[0].mxu0 %v814
        %v1258 = vpop.f32.mrb[0].mxu0
        %v1259 = vadd.f32 %v320, %v1258
        %v1260 = vpop.f32.mrb[0].mxu0
        %v1261 = vpop.f32.mrb[0].mxu0
        %v1262 = vadd.f32 %v320, %v1261
        %v1263 = vpop.f32.mrb[0].mxu0
        %1264 = vmatprep.mubr.bf16.mxu0 0
        %1265 = vmatmul.mubr.bf16.gmra.mrb[0].mxu0 %v817
        %v1266 = vpop.f32.mrb[0].mxu0
        %v1267 = vadd.f32 %v320, %v1266
        %v1268 = vpop.f32.mrb[0].mxu0
        %v1269 = vpop.f32.mrb[0].mxu0
        %v1270 = vadd.f32 %v320, %v1269
        %v1271 = vpop.f32.mrb[0].mxu0
        %1272 = vmatprep.mubr.bf16.mxu0 0
        %1273 = vmatmul.mubr.bf16.gmra.mrb[0].mxu0 %v820
        %v1274 = vpop.f32.mrb[0].mxu0
        %v1275 = vadd.f32 %v320, %v1274
        %v1276 = vpop.f32.mrb[0].mxu0
        %v1277 = vpop.f32.mrb[0].mxu0
        %v1278 = vadd.f32 %v320, %v1277
        %v1279 = vpop.f32.mrb[0].mxu0
        %1280 = vmatprep.mubr.bf16.mxu0 0
        %1281 = vmatmul.mubr.bf16.gmra.mrb[0].mxu0 %v823
        %v1282 = vpop.f32.mrb[0].mxu0
        %v1283 = vadd.f32 %v320, %v1282
        %v1284 = vpop.f32.mrb[0].mxu0
        %v1285 = vpop.f32.mrb[0].mxu0
        %v1286 = vadd.f32 %v320, %v1285
        %v1287 = vpop.f32.mrb[0].mxu0
        %1288 = vmatprep.mubr.bf16.mxu0 0
        %1289 = vmatmul.mubr.bf16.gmra.mrb[0].mxu0 %v826
        %v1290 = vpop.f32.mrb[0].mxu0
        %v1291 = vadd.f32 %v320, %v1290
        %v1292 = vpop.f32.mrb[0].mxu0
        %v1293 = vpop.f32.mrb[0].mxu0
        %v1294 = vadd.f32 %v320, %v1293
        %v1295 = vpop.f32.mrb[0].mxu0
        %1296 = vmatprep.mubr.bf16.mxu0 0
        %1297 = vmatmul.mubr.bf16.gmra.mrb[0].mxu0 %v829
        %v1298 = vpop.f32.mrb[0].mxu0
        %v1299 = vadd.f32 %v320, %v1298
        %v1300 = vpop.f32.mrb[0].mxu0
        %v1301 = vpop.f32.mrb[0].mxu0
        %v1302 = vadd.f32 %v320, %v1301
        %v1303 = vpop.f32.mrb[0].mxu0
        %1304 = vmatprep.mubr.bf16.mxu0 0
        %1305 = vmatmul.mubr.bf16.gmra.mrb[0].mxu0 %v832
        %v1306 = vpop.f32.mrb[0].mxu0
        %v1307 = vadd.f32 %v320, %v1306
        %v1308 = vpop.f32.mrb[0].mxu0
        %v1309 = vpop.f32.mrb[0].mxu0
        %v1310 = vadd.f32 %v320, %v1309
        %v1311 = vpop.f32.mrb[0].mxu0
        %1312 = vmatprep.mubr.bf16.mxu0 0
        %1313 = vmatmul.mubr.bf16.gmra.mrb[0].mxu0 %v835
        %v1314 = vpop.f32.mrb[0].mxu0
        %v1315 = vadd.f32 %v320, %v1314
        %v1316 = vpop.f32.mrb[0].mxu0
        %v1317 = vpop.f32.mrb[0].mxu0
        %v1318 = vadd.f32 %v320, %v1317
        %v1319 = vpop.f32.mrb[0].mxu0
        %1320 = vmatprep.mubr.bf16.mxu0 0
        %1321 = vmatmul.mubr.bf16.gmra.mrb[0].mxu0 %v838
        %v1322 = vpop.f32.mrb[0].mxu0
        %v1323 = vadd.f32 %v320, %v1322
        %v1324 = vpop.f32.mrb[0].mxu0
        %v1325 = vpop.f32.mrb[0].mxu0
        %v1326 = vadd.f32 %v320, %v1325
        %v1327 = vpop.f32.mrb[0].mxu0
        %1328 = vmatprep.mubr.bf16.mxu0 0
        %1329 = vmatmul.mubr.bf16.gmra.mrb[0].mxu0 %v841
        %v1330 = vpop.f32.mrb[0].mxu0
        %v1331 = vadd.f32 %v320, %v1330
        %v1332 = vpop.f32.mrb[0].mxu0
        %v1333 = vpop.f32.mrb[0].mxu0
        %v1334 = vadd.f32 %v320, %v1333
        %v1335 = vpop.f32.mrb[0].mxu0
        %1336 = vmatprep.mubr.bf16.mxu0 0
        %1337 = vmatmul.mubr.bf16.gmra.mrb[0].mxu0 %v844
        %v1338 = vpop.f32.mrb[0].mxu0
        %v1339 = vadd.f32 %v320, %v1338
        %v1340 = vpop.f32.mrb[0].mxu0
        %v1341 = vpop.f32.mrb[0].mxu0
        %v1342 = vadd.f32 %v320, %v1341
        %v1343 = vpop.f32.mrb[0].mxu0
        %1344 = vmatprep.mubr.bf16.mxu0 0
        %1345 = vmatmul.mubr.bf16.gmra.mrb[0].mxu0 %v847
        %v1346 = vpop.f32.mrb[0].mxu0
        %v1347 = vadd.f32 %v320, %v1346
        %v1348 = vpop.f32.mrb[0].mxu0
        %v1349 = vpop.f32.mrb[0].mxu0
        %v1350 = vadd.f32 %v320, %v1349
        %v1351 = vpop.f32.mrb[0].mxu0
        %1352 = vmatprep.mubr.bf16.mxu0 0
        %1353 = vmatmul.mubr.bf16.gmra.mrb[0].mxu0 %v850
        %v1354 = vpop.f32.mrb[0].mxu0
        %v1355 = vadd.f32 %v320, %v1354
        %v1356 = vpop.f32.mrb[0].mxu0
        %v1357 = vpop.f32.mrb[0].mxu0
        %v1358 = vadd.f32 %v320, %v1357
        %v1359 = vpop.f32.mrb[0].mxu0
        %1360 = vmatprep.mubr.bf16.mxu0 0
        %1361 = vmatmul.mubr.bf16.gmra.mrb[0].mxu0 %v853
        %v1362 = vpop.f32.mrb[0].mxu0
        %v1363 = vadd.f32 %v320, %v1362
        %v1364 = vpop.f32.mrb[0].mxu0
        %v1365 = vpop.f32.mrb[0].mxu0
        %v1366 = vadd.f32 %v320, %v1365
        %v1367 = vpop.f32.mrb[0].mxu0
        %1368 = vmatprep.mubr.bf16.mxu0 0
        %1369 = vmatmul.mubr.bf16.gmra.mrb[0].mxu0 %v856
        %v1370 = vpop.f32.mrb[0].mxu0
        %v1371 = vadd.f32 %v320, %v1370
        %v1372 = vpop.f32.mrb[0].mxu0
        %v1373 = vpop.f32.mrb[0].mxu0
        %v1374 = vadd.f32 %v320, %v1373
        %v1375 = vpop.f32.mrb[0].mxu0
        %1376 = vmatprep.mubr.bf16.mxu0 0
        %1377 = vmatmul.mubr.bf16.gmra.mrb[0].mxu0 %v859
        %v1378 = vpop.f32.mrb[0].mxu0
        %v1379 = vadd.f32 %v320, %v1378
        %v1380 = vpop.f32.mrb[0].mxu0
        %v1381 = vpop.f32.mrb[0].mxu0
        %v1382 = vadd.f32 %v320, %v1381
        %v1383 = vpop.f32.mrb[0].mxu0
        %1384 = vmatprep.mubr.bf16.mxu0 0
        %1385 = vmatmul.mubr.bf16.gmra.mrb[0].mxu0 %v862
        %v1386 = vpop.f32.mrb[0].mxu0
        %v1387 = vadd.f32 %v320, %v1386
        %v1388 = vpop.f32.mrb[0].mxu0
        %v1389 = vpop.f32.mrb[0].mxu0
        %v1390 = vadd.f32 %v320, %v1389
        %v1391 = vpop.f32.mrb[0].mxu0
        %1392 = vmatprep.mubr.bf16.mxu0 0
        %1393 = vmatmul.mubr.bf16.gmra.mrb[0].mxu0 %v865
        %v1394 = vpop.f32.mrb[0].mxu0
        %v1395 = vadd.f32 %v320, %v1394
        %v1396 = vpop.f32.mrb[0].mxu0
        %v1397 = vpop.f32.mrb[0].mxu0
        %v1398 = vadd.f32 %v320, %v1397
        %v1399 = vpop.f32.mrb[0].mxu0
        %1400 = vmatprep.mubr.bf16.mxu0 0
        %1401 = vmatmul.mubr.bf16.gmra.mrb[0].mxu0 %v868
        %v1402 = vpop.f32.mrb[0].mxu0
        %v1403 = vadd.f32 %v320, %v1402
        %v1404 = vpop.f32.mrb[0].mxu0
        %v1405 = vpop.f32.mrb[0].mxu0
        %v1406 = vadd.f32 %v320, %v1405
        %v1407 = vpop.f32.mrb[0].mxu0
        %1408 = vmatprep.mubr.bf16.mxu0 0
        %1409 = vmatmul.mubr.bf16.gmra.mrb[0].mxu0 %v871
        %v1410 = vpop.f32.mrb[0].mxu0
        %v1411 = vadd.f32 %v320, %v1410
        %v1412 = vpop.f32.mrb[0].mxu0
        %v1413 = vpop.f32.mrb[0].mxu0
        %v1414 = vadd.f32 %v320, %v1413
        %v1415 = vpop.f32.mrb[0].mxu0
        %1416 = vmatprep.mubr.bf16.mxu0 0
        %1417 = vmatmul.mubr.bf16.gmra.mrb[0].mxu0 %v874
        %v1418 = vpop.f32.mrb[0].mxu0
        %v1419 = vadd.f32 %v320, %v1418
        %v1420 = vpop.f32.mrb[0].mxu0
        %v1421 = vpop.f32.mrb[0].mxu0
        %v1422 = vadd.f32 %v320, %v1421
        %v1423 = vpop.f32.mrb[0].mxu0
        %1424 = vdwg.mxu0
        %v1425 = vmax.f32 %v915, 0.0
        %v1426 = vmax.f32 %v918, 0.0
        %v1427 = vmax.f32 %v923, 0.0
        %v1428 = vmax.f32 %v926, 0.0
        %v1429 = vmax.f32 %v931, 0.0
        %v1430 = vmax.f32 %v934, 0.0
        %v1431 = vmax.f32 %v939, 0.0
        %v1432 = vmax.f32 %v942, 0.0
        %v1433 = vmax.f32 %v947, 0.0
        %v1434 = vmax.f32 %v950, 0.0
        %v1435 = vmax.f32 %v955, 0.0
        %v1436 = vmax.f32 %v958, 0.0
        %v1437 = vmax.f32 %v963, 0.0
        %v1438 = vmax.f32 %v966, 0.0
        %v1439 = vmax.f32 %v971, 0.0
        %v1440 = vmax.f32 %v974, 0.0
        %v1441 = vmax.f32 %v979, 0.0
        %v1442 = vmax.f32 %v982, 0.0
        %v1443 = vmax.f32 %v987, 0.0
        %v1444 = vmax.f32 %v990, 0.0
        %v1445 = vmax.f32 %v995, 0.0
        %v1446 = vmax.f32 %v998, 0.0
        %v1447 = vmax.f32 %v1003, 0.0
        %v1448 = vmax.f32 %v1006, 0.0
        %v1449 = vmax.f32 %v1011, 0.0
        %v1450 = vmax.f32 %v1014, 0.0
        %v1451 = vmax.f32 %v1019, 0.0
        %v1452 = vmax.f32 %v1022, 0.0
        %v1453 = vmax.f32 %v1027, 0.0
        %v1454 = vmax.f32 %v1030, 0.0
        %v1455 = vmax.f32 %v1035, 0.0
        %v1456 = vmax.f32 %v1038, 0.0
        %v1457 = vmax.f32 %v1043, 0.0
        %v1458 = vmax.f32 %v1046, 0.0
        %v1459 = vmax.f32 %v1051, 0.0
        %v1460 = vmax.f32 %v1054, 0.0
        %v1461 = vmax.f32 %v1059, 0.0
        %v1462 = vmax.f32 %v1062, 0.0
        %v1463 = vmax.f32 %v1067, 0.0
        %v1464 = vmax.f32 %v1070, 0.0
        %v1465 = vmax.f32 %v1075, 0.0
        %v1466 = vmax.f32 %v1078, 0.0
        %v1467 = vmax.f32 %v1083, 0.0
        %v1468 = vmax.f32 %v1086, 0.0
        %v1469 = vmax.f32 %v1091, 0.0
        %v1470 = vmax.f32 %v1094, 0.0
        %v1471 = vmax.f32 %v1099, 0.0
        %v1472 = vmax.f32 %v1102, 0.0
        %v1473 = vmax.f32 %v1107, 0.0
        %v1474 = vmax.f32 %v1110, 0.0
        %v1475 = vmax.f32 %v1115, 0.0
        %v1476 = vmax.f32 %v1118, 0.0
        %v1477 = vmax.f32 %v1123, 0.0
        %v1478 = vmax.f32 %v1126, 0.0
        %v1479 = vmax.f32 %v1131, 0.0
        %v1480 = vmax.f32 %v1134, 0.0
        %v1481 = vmax.f32 %v1139, 0.0
        %v1482 = vmax.f32 %v1142, 0.0
        %v1483 = vmax.f32 %v1147, 0.0
        %v1484 = vmax.f32 %v1150, 0.0
        %v1485 = vmax.f32 %v1155, 0.0
        %v1486 = vmax.f32 %v1158, 0.0
        %v1487 = vmax.f32 %v1163, 0.0
        %v1488 = vmax.f32 %v1166, 0.0
        %v1489 = vmax.f32 %v1171, 0.0
        %v1490 = vmax.f32 %v1174, 0.0
        %v1491 = vmax.f32 %v1179, 0.0
        %v1492 = vmax.f32 %v1182, 0.0
        %v1493 = vmax.f32 %v1187, 0.0
        %v1494 = vmax.f32 %v1190, 0.0
        %v1495 = vmax.f32 %v1195, 0.0
        %v1496 = vmax.f32 %v1198, 0.0
        %v1497 = vmax.f32 %v1203, 0.0
        %v1498 = vmax.f32 %v1206, 0.0
        %v1499 = vmax.f32 %v1211, 0.0
        %v1500 = vmax.f32 %v1214, 0.0
        %v1501 = vmax.f32 %v1219, 0.0
        %v1502 = vmax.f32 %v1222, 0.0
        %v1503 = vmax.f32 %v1227, 0.0
        %v1504 = vmax.f32 %v1230, 0.0
        %v1505 = vmax.f32 %v1235, 0.0
        %v1506 = vmax.f32 %v1238, 0.0
        %v1507 = vmax.f32 %v1243, 0.0
        %v1508 = vmax.f32 %v1246, 0.0
        %v1509 = vmax.f32 %v1251, 0.0
        %v1510 = vmax.f32 %v1254, 0.0
        %v1511 = vmax.f32 %v1259, 0.0
        %v1512 = vmax.f32 %v1262, 0.0
        %v1513 = vmax.f32 %v1267, 0.0
        %v1514 = vmax.f32 %v1270, 0.0
        %v1515 = vmax.f32 %v1275, 0.0
        %v1516 = vmax.f32 %v1278, 0.0
        %v1517 = vmax.f32 %v1283, 0.0
        %v1518 = vmax.f32 %v1286, 0.0
        %v1519 = vmax.f32 %v1291, 0.0
        %v1520 = vmax.f32 %v1294, 0.0
        %v1521 = vmax.f32 %v1299, 0.0
        %v1522 = vmax.f32 %v1302, 0.0
        %v1523 = vmax.f32 %v1307, 0.0
        %v1524 = vmax.f32 %v1310, 0.0
        %v1525 = vmax.f32 %v1315, 0.0
        %v1526 = vmax.f32 %v1318, 0.0
        %v1527 = vmax.f32 %v1323, 0.0
        %v1528 = vmax.f32 %v1326, 0.0
        %v1529 = vmax.f32 %v1331, 0.0
        %v1530 = vmax.f32 %v1334, 0.0
        %v1531 = vmax.f32 %v1339, 0.0
        %v1532 = vmax.f32 %v1342, 0.0
        %v1533 = vmax.f32 %v1347, 0.0
        %v1534 = vmax.f32 %v1350, 0.0
        %v1535 = vmax.f32 %v1355, 0.0
        %v1536 = vmax.f32 %v1358, 0.0
        %v1537 = vmax.f32 %v1363, 0.0
        %v1538 = vmax.f32 %v1366, 0.0
        %v1539 = vmax.f32 %v1371, 0.0
        %v1540 = vmax.f32 %v1374, 0.0
        %v1541 = vmax.f32 %v1379, 0.0
        %v1542 = vmax.f32 %v1382, 0.0
        %v1543 = vmax.f32 %v1387, 0.0
        %v1544 = vmax.f32 %v1390, 0.0
        %v1545 = vmax.f32 %v1395, 0.0
        %v1546 = vmax.f32 %v1398, 0.0
        %v1547 = vmax.f32 %v1403, 0.0
        %v1548 = vmax.f32 %v1406, 0.0
        %v1549 = vmax.f32 %v1411, 0.0
        %v1550 = vmax.f32 %v1414, 0.0
        %v1551 = vmax.f32 %v1419, 0.0
        %v1552 = vmax.f32 %v1422, 0.0
        %1553 = vst [vmem:[%s164] sm:$0xff] %v1425
        %1554 = vst [vmem:[%s164 + $0x8] sm:$0xff] %v1426
        %1555 = vst [vmem:[%s164 + $0x10] sm:$0xff] %v1427
        %1556 = vst [vmem:[%s164 + $0x18] sm:$0xff] %v1428
        %1557 = vst [vmem:[%s164 + $0x20] sm:$0xff] %v1429
        %1558 = vst [vmem:[%s164 + $0x28] sm:$0xff] %v1430
        %1559 = vst [vmem:[%s164 + $0x30] sm:$0xff] %v1431
        %1560 = vst [vmem:[%s164 + $0x38] sm:$0xff] %v1432
        %1561 = vst [vmem:[%s164 + $0x40] sm:$0xff] %v1433
        %1562 = vst [vmem:[%s164 + $0x48] sm:$0xff] %v1434
        %1563 = vst [vmem:[%s164 + $0x50] sm:$0xff] %v1435
        %1564 = vst [vmem:[%s164 + $0x58] sm:$0xff] %v1436
        %1565 = vst [vmem:[%s164 + $0x60] sm:$0xff] %v1437
        %1566 = vst [vmem:[%s164 + $0x68] sm:$0xff] %v1438
        %1567 = vst [vmem:[%s164 + $0x70] sm:$0xff] %v1439
        %1568 = vst [vmem:[%s164 + $0x78] sm:$0xff] %v1440
        %1569 = vst [vmem:[%s164 + $0x80] sm:$0xff] %v1441
        %1570 = vst [vmem:[%s164 + $0x88] sm:$0xff] %v1442
        %1571 = vst [vmem:[%s164 + $0x90] sm:$0xff] %v1443
        %1572 = vst [vmem:[%s164 + $0x98] sm:$0xff] %v1444
        %1573 = vst [vmem:[%s164 + $0xa0] sm:$0xff] %v1445
        %1574 = vst [vmem:[%s164 + $0xa8] sm:$0xff] %v1446
        %1575 = vst [vmem:[%s164 + $0xb0] sm:$0xff] %v1447
        %1576 = vst [vmem:[%s164 + $0xb8] sm:$0xff] %v1448
        %1577 = vst [vmem:[%s164 + $0xc0] sm:$0xff] %v1449
        %1578 = vst [vmem:[%s164 + $0xc8] sm:$0xff] %v1450
        %1579 = vst [vmem:[%s164 + $0xd0] sm:$0xff] %v1451
        %1580 = vst [vmem:[%s164 + $0xd8] sm:$0xff] %v1452
        %1581 = vst [vmem:[%s164 + $0xe0] sm:$0xff] %v1453
        %1582 = vst [vmem:[%s164 + $0xe8] sm:$0xff] %v1454
        %1583 = vst [vmem:[%s164 + $0xf0] sm:$0xff] %v1455
        %1584 = vst [vmem:[%s164 + $0xf8] sm:$0xff] %v1456
        %1585 = vst [vmem:[%s164 + $0x100] sm:$0xff] %v1457
        %1586 = vst [vmem:[%s164 + $0x108] sm:$0xff] %v1458
        %1587 = vst [vmem:[%s164 + $0x110] sm:$0xff] %v1459
        %1588 = vst [vmem:[%s164 + $0x118] sm:$0xff] %v1460
        %1589 = vst [vmem:[%s164 + $0x120] sm:$0xff] %v1461
        %1590 = vst [vmem:[%s164 + $0x128] sm:$0xff] %v1462
        %1591 = vst [vmem:[%s164 + $0x130] sm:$0xff] %v1463
        %1592 = vst [vmem:[%s164 + $0x138] sm:$0xff] %v1464
        %1593 = vst [vmem:[%s164 + $0x140] sm:$0xff] %v1465
        %1594 = vst [vmem:[%s164 + $0x148] sm:$0xff] %v1466
        %1595 = vst [vmem:[%s164 + $0x150] sm:$0xff] %v1467
        %1596 = vst [vmem:[%s164 + $0x158] sm:$0xff] %v1468
        %1597 = vst [vmem:[%s164 + $0x160] sm:$0xff] %v1469
        %1598 = vst [vmem:[%s164 + $0x168] sm:$0xff] %v1470
        %1599 = vst [vmem:[%s164 + $0x170] sm:$0xff] %v1471
        %1600 = vst [vmem:[%s164 + $0x178] sm:$0xff] %v1472
        %1601 = vst [vmem:[%s164 + $0x180] sm:$0xff] %v1473
        %1602 = vst [vmem:[%s164 + $0x188] sm:$0xff] %v1474
        %1603 = vst [vmem:[%s164 + $0x190] sm:$0xff] %v1475
        %1604 = vst [vmem:[%s164 + $0x198] sm:$0xff] %v1476
        %1605 = vst [vmem:[%s164 + $0x1a0] sm:$0xff] %v1477
        %1606 = vst [vmem:[%s164 + $0x1a8] sm:$0xff] %v1478
        %1607 = vst [vmem:[%s164 + $0x1b0] sm:$0xff] %v1479
        %1608 = vst [vmem:[%s164 + $0x1b8] sm:$0xff] %v1480
        %1609 = vst [vmem:[%s164 + $0x1c0] sm:$0xff] %v1481
        %1610 = vst [vmem:[%s164 + $0x1c8] sm:$0xff] %v1482
        %1611 = vst [vmem:[%s164 + $0x1d0] sm:$0xff] %v1483
        %1612 = vst [vmem:[%s164 + $0x1d8] sm:$0xff] %v1484
        %1613 = vst [vmem:[%s164 + $0x1e0] sm:$0xff] %v1485
        %1614 = vst [vmem:[%s164 + $0x1e8] sm:$0xff] %v1486
        %1615 = vst [vmem:[%s164 + $0x1f0] sm:$0xff] %v1487
        %1616 = vst [vmem:[%s164 + $0x1f8] sm:$0xff] %v1488
        %1617 = vst [vmem:[%s164 + $0x200] sm:$0xff] %v1489
        %1618 = vst [vmem:[%s164 + $0x208] sm:$0xff] %v1490
        %1619 = vst [vmem:[%s164 + $0x210] sm:$0xff] %v1491
        %1620 = vst [vmem:[%s164 + $0x218] sm:$0xff] %v1492
        %1621 = vst [vmem:[%s164 + $0x220] sm:$0xff] %v1493
        %1622 = vst [vmem:[%s164 + $0x228] sm:$0xff] %v1494
        %1623 = vst [vmem:[%s164 + $0x230] sm:$0xff] %v1495
        %1624 = vst [vmem:[%s164 + $0x238] sm:$0xff] %v1496
        %1625 = vst [vmem:[%s164 + $0x240] sm:$0xff] %v1497
        %1626 = vst [vmem:[%s164 + $0x248] sm:$0xff] %v1498
        %1627 = vst [vmem:[%s164 + $0x250] sm:$0xff] %v1499
        %1628 = vst [vmem:[%s164 + $0x258] sm:$0xff] %v1500
        %1629 = vst [vmem:[%s164 + $0x260] sm:$0xff] %v1501
        %1630 = vst [vmem:[%s164 + $0x268] sm:$0xff] %v1502
        %1631 = vst [vmem:[%s164 + $0x270] sm:$0xff] %v1503
        %1632 = vst [vmem:[%s164 + $0x278] sm:$0xff] %v1504
        %1633 = vst [vmem:[%s164 + $0x280] sm:$0xff] %v1505
        %1634 = vst [vmem:[%s164 + $0x288] sm:$0xff] %v1506
        %1635 = vst [vmem:[%s164 + $0x290] sm:$0xff] %v1507
        %1636 = vst [vmem:[%s164 + $0x298] sm:$0xff] %v1508
        %1637 = vst [vmem:[%s164 + $0x2a0] sm:$0xff] %v1509
        %1638 = vst [vmem:[%s164 + $0x2a8] sm:$0xff] %v1510
        %1639 = vst [vmem:[%s164 + $0x2b0] sm:$0xff] %v1511
        %1640 = vst [vmem:[%s164 + $0x2b8] sm:$0xff] %v1512
        %1641 = vst [vmem:[%s164 + $0x2c0] sm:$0xff] %v1513
        %1642 = vst [vmem:[%s164 + $0x2c8] sm:$0xff] %v1514
        %1643 = vst [vmem:[%s164 + $0x2d0] sm:$0xff] %v1515
        %1644 = vst [vmem:[%s164 + $0x2d8] sm:$0xff] %v1516
        %1645 = vst [vmem:[%s164 + $0x2e0] sm:$0xff] %v1517
        %1646 = vst [vmem:[%s164 + $0x2e8] sm:$0xff] %v1518
        %1647 = vst [vmem:[%s164 + $0x2f0] sm:$0xff] %v1519
        %1648 = vst [vmem:[%s164 + $0x2f8] sm:$0xff] %v1520
        %1649 = vst [vmem:[%s164 + $0x300] sm:$0xff] %v1521
        %1650 = vst [vmem:[%s164 + $0x308] sm:$0xff] %v1522
        %1651 = vst [vmem:[%s164 + $0x310] sm:$0xff] %v1523
        %1652 = vst [vmem:[%s164 + $0x318] sm:$0xff] %v1524
        %1653 = vst [vmem:[%s164 + $0x320] sm:$0xff] %v1525
        %1654 = vst [vmem:[%s164 + $0x328] sm:$0xff] %v1526
        %1655 = vst [vmem:[%s164 + $0x330] sm:$0xff] %v1527
        %1656 = vst [vmem:[%s164 + $0x338] sm:$0xff] %v1528
        %1657 = vst [vmem:[%s164 + $0x340] sm:$0xff] %v1529
        %1658 = vst [vmem:[%s164 + $0x348] sm:$0xff] %v1530
        %1659 = vst [vmem:[%s164 + $0x350] sm:$0xff] %v1531
        %1660 = vst [vmem:[%s164 + $0x358] sm:$0xff] %v1532
        %1661 = vst [vmem:[%s164 + $0x360] sm:$0xff] %v1533
        %1662 = vst [vmem:[%s164 + $0x368] sm:$0xff] %v1534
        %1663 = vst [vmem:[%s164 + $0x370] sm:$0xff] %v1535
        %1664 = vst [vmem:[%s164 + $0x378] sm:$0xff] %v1536
        %1665 = vst [vmem:[%s164 + $0x380] sm:$0xff] %v1537
        %1666 = vst [vmem:[%s164 + $0x388] sm:$0xff] %v1538
        %1667 = vst [vmem:[%s164 + $0x390] sm:$0xff] %v1539
        %1668 = vst [vmem:[%s164 + $0x398] sm:$0xff] %v1540
        %1669 = vst [vmem:[%s164 + $0x3a0] sm:$0xff] %v1541
        %1670 = vst [vmem:[%s164 + $0x3a8] sm:$0xff] %v1542
        %1671 = vst [vmem:[%s164 + $0x3b0] sm:$0xff] %v1543
        %1672 = vst [vmem:[%s164 + $0x3b8] sm:$0xff] %v1544
        %1673 = vst [vmem:[%s164 + $0x3c0] sm:$0xff] %v1545
        %1674 = vst [vmem:[%s164 + $0x3c8] sm:$0xff] %v1546
        %1675 = vst [vmem:[%s164 + $0x3d0] sm:$0xff] %v1547
        %1676 = vst [vmem:[%s164 + $0x3d8] sm:$0xff] %v1548
        %1677 = vst [vmem:[%s164 + $0x3e0] sm:$0xff] %v1549
        %1678 = vst [vmem:[%s164 + $0x3e8] sm:$0xff] %v1550
        %1679 = vst [vmem:[%s164 + $0x3f0] sm:$0xff] %v1551
        %1680 = vst [vmem:[%s164 + $0x3f8] sm:$0xff] %v1552
        %s1681 = sand.u32 %s93, 1
        %s1682 = scalar_lea.sflag [#allocation3], %s1681
        %s1683 = sand.u32 %s93, 1
        %s1684 = smul.addr %s1683, 1024
        %s1685 = scalar_lea.vmem [#allocation2], %s1684
        // Predicated region
        $region33: #{tpu_custom_call.1} parent=31 // pred_check
          %p1686 = pneg %p103
        $region34: #{tpu_custom_call.1} parent=31 // pred_check_branch
          %1688 = sbr.rel (%p1686) target = $region36
        $region35: #{tpu_custom_call.1} parent=31 // pred_region
          %s1689 = smul.u32 128, %s17
          %s1691 = ssub.s32 16384, 16384
          %1692 = vsyncadd %s1682, %s1691
          %s1693 = smul.addr %s1689, 128
          %s1694 = scalar_lea.hbm %s3, %s1693
          %s1695 = sshll.u32 %s1685, 4
          %s1696 = int_to_ptr.vmem [resolvable:$true] %s1695
          %1701 = dma.vmem_to_hbm [thread:$0]  %s1696, 16384, %s1694, %s1682, 128, 128, 8
        $region36: #{tpu_custom_call.1} parent=31 // pred_fallthru
          _
      $region32: #{tpu_custom_call.1} parent=5 // pred_fallthru
        _
      %p1702 = scmp.le.s32.totalorder 2, %s12
      // Predicated region
      $region37: #{tpu_custom_call.1} parent=5 // pred_check
        %p1703 = pneg %p1702
      $region38: #{tpu_custom_call.1} parent=5 // pred_check_branch
        %1705 = sbr.rel (%p1703) target = $region40
      $region39: #{tpu_custom_call.1} parent=5 // pred_region
        %s1706 = ssub.s32 %s12, 2
        // Predicated region
        $region41: #{tpu_custom_call.1} parent=39 // pred_check
          %p1707 = pneg %p109
        $region42: #{tpu_custom_call.1} parent=39 // pred_check_branch
          %1709 = sbr.rel (%p1707) target = $region44
        $region43: #{tpu_custom_call.1} parent=39 // pred_region
          %s1710 = sand.u32 %s94, 1
          %s1711 = scalar_lea.sflag [#allocation3], %s1710
          %s1712 = sand.u32 %s94, 1
          %s1713 = smul.addr %s1712, 1024
          %s1714 = scalar_lea.vmem [#allocation2], %s1713
          %1715 = dma.done %s1711, 16384
        $region44: #{tpu_custom_call.1} parent=39 // pred_fallthru
          _
      $region40: #{tpu_custom_call.1} parent=5 // pred_fallthru
        _
    $region6: #{tpu_custom_call.1} parent=1 // loop_footer
      %s16 = sadd.s32 1, %s12
    $region7: #{tpu_custom_call.1} parent=1 // loop_footer_branch
      %11 = sbr.rel target = $region3
    $region8: #{tpu_custom_call.1} parent=1 // loop_exit
      _
    %1716 = vsyncpa [#allocation3], 1
    %s1717 = scalar_lea.sflag [#allocation3], 1
    %1718 = vsyncpa %s1717, 1

</llo_original>
